<compile_context>
chip_gen: v5e
topology: v5e:2x2
jax: 0.10.0
libtpu: 0.0.40
codegen_flags: <defaults>
</compile_context>

<pallas_src>
import functools
import math

import jax
import jax.numpy as jnp
from jax.experimental import pallas as pl
from jax.experimental.pallas import tpu as pltpu


def _layer_norm(x, gamma, beta, eps=1e-5):
    mean = jnp.mean(x, axis=-1, keepdims=True)
    var = jnp.mean((x - mean) ** 2, axis=-1, keepdims=True)   # biased, like nn.LayerNorm
    return (x - mean) * jax.lax.rsqrt(var + eps) * gamma + beta


def gpt_decoder_block_kernel(num_heads,
                             x_ref,
                             wq_ref, bq_ref, wk_ref, bk_ref, wv_ref, bv_ref,
                             wo_ref, bo_ref, g1_ref, be1_ref,
                             w1_ref, b1_ref, w2_ref, b2_ref, g2_ref, be2_ref,
                             out_ref,
                             att_cat_ref):
    # One grid step == one batch element.
    x = x_ref[0]                                 # (T, D) f32
    T, D = x.shape
    hd = D // num_heads
    scale = 1.0 / math.sqrt(hd)

    x_bf = x.astype(jnp.bfloat16)

    # --- QKV projections: full-width (T,D)@(D,D) matmuls, bf16 in / f32 acc ---
    q = jnp.dot(x_bf, wq_ref[...], preferred_element_type=jnp.float32) + bq_ref[...]
    k = jnp.dot(x_bf, wk_ref[...], preferred_element_type=jnp.float32) + bk_ref[...]
    v = jnp.dot(x_bf, wv_ref[...], preferred_element_type=jnp.float32) + bv_ref[...]
    q = q * scale                                # fold 1/sqrt(hd) into q (T*D, not T*T)

    row = jax.lax.broadcasted_iota(jnp.int32, (T, T), 0)
    col = jax.lax.broadcasted_iota(jnp.int32, (T, T), 1)
    causal = row >= col
    neg_big = jnp.float32(-1e30)                 # finite: robust even for fully-masked rows

    # --- masked multi-head attention ---
    # Per-head QK^T via dot_general contracting the head dim (no explicit .T).
    # Each head's output is stored into its static column slice of a bf16 VMEM
    # scratch (== concat(heads)); a single full-K matmul with wo follows.
    dn_qkt = (((1,), (1,)), ((), ()))            # contract q's head dim with k's head dim
    for h in range(num_heads):                   # static, small unrolled loop
        sl = slice(h * hd, (h + 1) * hd)
        qh = q[:, sl].astype(jnp.bfloat16)
        kh = k[:, sl].astype(jnp.bfloat16)
        vh = v[:, sl].astype(jnp.bfloat16)

        s = jax.lax.dot_general(qh, kh, dn_qkt,
                                preferred_element_type=jnp.float32)   # (T, T)
        s = jnp.where(causal, s, neg_big)
        s = s - jnp.max(s, axis=-1, keepdims=True)
        p = jnp.exp(s)
        # Approx reciprocal (EUP slot) -- flagged: ~1e-3 rel. error in probs.
        p = p * pl.reciprocal(jnp.sum(p, axis=-1, keepdims=True), approx=True)

        ah = jnp.dot(p.astype(jnp.bfloat16), vh,
                     preferred_element_type=jnp.float32)              # (T, hd)
        att_cat_ref[:, sl] = ah.astype(jnp.bfloat16)

    # Single output projection over the concatenated heads (full contraction D).
    att = jnp.dot(att_cat_ref[...], wo_ref[...],
                  preferred_element_type=jnp.float32) + bo_ref[...]

    # residual + LayerNorm 1 (f32)
    y = _layer_norm(x + att, g1_ref[...], be1_ref[...])

    # --- feed-forward block (bf16 matmuls, f32 accumulation / norms) ---
    # Fuse bias + ReLU and immediately narrow to bf16: only a bf16 (T, 4D)
    # hidden stays live.
    h1 = jnp.maximum(
        jnp.dot(y.astype(jnp.bfloat16), w1_ref[...],
                preferred_element_type=jnp.float32) + b1_ref[...],
        0.0).astype(jnp.bfloat16)
    h2 = jnp.dot(h1, w2_ref[...],
                 preferred_element_type=jnp.float32) + b2_ref[...]

    # residual + LayerNorm 2 (f32)
    out = _layer_norm(y + h2, g2_ref[...], be2_ref[...])
    out_ref[0] = out.astype(out_ref.dtype)


def gpt_decoder_block(x, params, num_heads):
    B, T, D = x.shape
    (wq, bq, wk, bk, wv, bv, wo, bo, g1, be1, w1, b1, w2, b2, g2, be2) = params
    d_ff = w1.shape[1]

    # Weights are already bf16 (cast once at creation time); biases / LayerNorm
    # params are f32 (added after f32 accumulation).
    kernel_params = [wq, bq, wk, bk, wv, bv, wo, bo, g1, be1,
                     w1, b1, w2, b2, g2, be2]

    def weight_spec(p):
        nd = p.ndim
        # Grid-invariant index map -> single-buffer (double-buffering these only
        # doubles resident VMEM without hiding any DMA).
        return pl.BlockSpec(p.shape, lambda b, _nd=nd: (0,) * _nd,
                            pipeline_mode=pl.Buffered(1))
    weight_specs = [weight_spec(p) for p in kernel_params]

    # VMEM budget:
    #   double-buffered x/out activation blocks
    # + single-buffered resident weights
    # + in-kernel intermediates: q/k/v/att/y/h2 f32, 2x (T,T) score tiles f32,
    #   att_cat + h1 bf16.
    weight_bytes = sum(int(p.size) * p.dtype.itemsize for p in kernel_params)
    interm_bytes = 4 * (6 * T * D + 2 * T * T) + 2 * (T * D + T * d_ff)
    est = 2 * (2 * T * D * x.dtype.itemsize) + weight_bytes + interm_bytes

    try:
        vmem_cap = int(pltpu.get_tpu_info().vmem_capacity_bytes)
    except Exception:
        vmem_cap = 64 * 1024 * 1024              # conservative (v7x per-TC)
    vmem_limit = int(min(0.9 * vmem_cap, max(32 * 1024 * 1024, est)))

    # NOTE: real configurations should use T, D multiples of 128 (lane-dense,
    # unmasked stores); the tiny demo shape below produces masked partial
    # stores and is not representative of production layout.
    kernel = functools.partial(gpt_decoder_block_kernel, num_heads)
    return pl.pallas_call(
        kernel,
        out_shape=jax.ShapeDtypeStruct((B, T, D), x.dtype),
        grid_spec=pltpu.PrefetchScalarGridSpec(
            num_scalar_prefetch=0,
            grid=(B,),
            in_specs=[pl.BlockSpec((1, T, D), lambda b: (b, 0, 0))] + weight_specs,
            out_specs=pl.BlockSpec((1, T, D), lambda b: (b, 0, 0)),
            scratch_shapes=[pltpu.VMEM((T, D), jnp.bfloat16)],   # att_cat (concat heads)
        ),
        compiler_params=pltpu.CompilerParams(
            dimension_semantics=("parallel",),
            vmem_limit_bytes=vmem_limit),
    )(x, *kernel_params)


def make_params(key, d_model, num_heads):
    d_ff = 4 * d_model
    ks = jax.random.split(key, 6)
    std = 0.02
    # Big matmul weights are cast to bf16 ONCE here (no per-call convert / extra
    # HBM traffic in the wrapper). Biases / LayerNorm params stay f32.
    bf = lambda w: w.astype(jnp.bfloat16)
    wq = bf(std * jax.random.normal(ks[0], (d_model, d_model), jnp.float32))
    wk = bf(std * jax.random.normal(ks[1], (d_model, d_model), jnp.float32))
    wv = bf(std * jax.random.normal(ks[2], (d_model, d_model), jnp.float32))
    wo = bf(std * jax.random.normal(ks[3], (d_model, d_model), jnp.float32))
    w1 = bf(std * jax.random.normal(ks[4], (d_model, d_ff), jnp.float32))
    w2 = bf(std * jax.random.normal(ks[5], (d_ff, d_model), jnp.float32))
    zeros_d = jnp.zeros((1, d_model), jnp.float32)
    params = [
        wq, zeros_d, wk, zeros_d, wv, zeros_d, wo, zeros_d,          # attention
        jnp.ones((1, d_model), jnp.float32), zeros_d,                # LayerNorm 1 (gamma, beta)
        w1, jnp.zeros((1, d_ff), jnp.float32), w2, zeros_d,          # feed-forward
        jnp.ones((1, d_model), jnp.float32), zeros_d,                # LayerNorm 2 (gamma, beta)
    ]
    return params


def reference(x, params, num_heads):
    (wq, bq, wk, bk, wv, bv, wo, bo, g1, be1, w1, b1, w2, b2, g2, be2) = params
    f32 = lambda w: w.astype(jnp.float32)
    B, T, D = x.shape
    hd = D // num_heads
    q = x @ f32(wq) + bq
    k = x @ f32(wk) + bk
    v = x @ f32(wv) + bv
    q = q.reshape(B, T, num_heads, hd).transpose(0, 2, 1, 3)
    k = k.reshape(B, T, num_heads, hd).transpose(0, 2, 1, 3)
    v = v.reshape(B, T, num_heads, hd).transpose(0, 2, 1, 3)
    s = jnp.einsum("bhqd,bhkd->bhqk", q, k) / math.sqrt(hd)
    mask = jnp.tril(jnp.ones((T, T), bool))
    s = jnp.where(mask, s, -jnp.inf)
    p = jax.nn.softmax(s, axis=-1)
    att = jnp.einsum("bhqk,bhkd->bhqd", p, v).transpose(0, 2, 1, 3).reshape(B, T, D)
    att = att @ f32(wo) + bo
    y = _layer_norm(x + att, g1, be1)
    h = jnp.maximum(y @ f32(w1) + b1, 0.0) @ f32(w2) + b2
    return _layer_norm(y + h, g2, be2)


if __name__ == "__main__":
    B, T, D = 2, 8, 32
    num_heads = 2            # d_model=32, head_dim=16, vocab_len (max seq) >= T
    key = jax.random.PRNGKey(0)
    kx, kp = jax.random.split(key)
    x = jax.random.normal(kx, (B, T, D), jnp.float32)
    params = make_params(kp, D, num_heads)

    out = gpt_decoder_block(x, params, num_heads)
    out = jax.block_until_ready(out)

    ref = reference(x, params, num_heads)   # f32-math reference (same bf16 weights)
    assert out.shape == (B, T, D)
    # bf16 matmul operands + approx reciprocal => relax tolerance vs. f32 reference.
    assert jnp.allclose(out, ref, atol=2e-2, rtol=2e-2), "mismatch vs JAX reference"
    print("KERNEL_OK")
</pallas_src>

<mosaic_0001>
module attributes {stable_mosaic.version = 11 : i64} {
  func.func @gpt_decoder_block_kernel(%arg0: i32, %arg1: memref<1x8x32xf32, #tpu.memory_space<vmem>>, %arg2: memref<32x32xbf16, #tpu.memory_space<vmem>>, %arg3: memref<1x32xf32, #tpu.memory_space<vmem>>, %arg4: memref<32x32xbf16, #tpu.memory_space<vmem>>, %arg5: memref<1x32xf32, #tpu.memory_space<vmem>>, %arg6: memref<32x32xbf16, #tpu.memory_space<vmem>>, %arg7: memref<1x32xf32, #tpu.memory_space<vmem>>, %arg8: memref<32x32xbf16, #tpu.memory_space<vmem>>, %arg9: memref<1x32xf32, #tpu.memory_space<vmem>>, %arg10: memref<1x32xf32, #tpu.memory_space<vmem>>, %arg11: memref<1x32xf32, #tpu.memory_space<vmem>>, %arg12: memref<32x128xbf16, #tpu.memory_space<vmem>>, %arg13: memref<1x128xf32, #tpu.memory_space<vmem>>, %arg14: memref<128x32xbf16, #tpu.memory_space<vmem>>, %arg15: memref<1x32xf32, #tpu.memory_space<vmem>>, %arg16: memref<1x32xf32, #tpu.memory_space<vmem>>, %arg17: memref<1x32xf32, #tpu.memory_space<vmem>>, %arg18: memref<1x8x32xf32, #tpu.memory_space<vmem>>, %arg19: memref<8x32xbf16, #tpu.memory_space<vmem>>) attributes {dimension_semantics = [#tpu.dimension_semantics<parallel>], iteration_bounds = array<i64: 2>, scalar_prefetch = 0 : i64, scratch_operands = 1 : i64, tpu.core_type = #tpu.core_type<tc>, window_params = [{transform_indices = @transform_0, window_bounds = array<i64: 1, 8, 32>}, {pipeline_mode = #tpu.pipeline_mode<synchronous>, transform_indices = @transform_1, window_bounds = array<i64: 32, 32>}, {pipeline_mode = #tpu.pipeline_mode<synchronous>, transform_indices = @transform_2, window_bounds = array<i64: 1, 32>}, {pipeline_mode = #tpu.pipeline_mode<synchronous>, transform_indices = @transform_3, window_bounds = array<i64: 32, 32>}, {pipeline_mode = #tpu.pipeline_mode<synchronous>, transform_indices = @transform_4, window_bounds = array<i64: 1, 32>}, {pipeline_mode = #tpu.pipeline_mode<synchronous>, transform_indices = @transform_5, window_bounds = array<i64: 32, 32>}, {pipeline_mode = #tpu.pipeline_mode<synchronous>, transform_indices = @transform_6, window_bounds = array<i64: 1, 32>}, {pipeline_mode = #tpu.pipeline_mode<synchronous>, transform_indices = @transform_7, window_bounds = array<i64: 32, 32>}, {pipeline_mode = #tpu.pipeline_mode<synchronous>, transform_indices = @transform_8, window_bounds = array<i64: 1, 32>}, {pipeline_mode = #tpu.pipeline_mode<synchronous>, transform_indices = @transform_9, window_bounds = array<i64: 1, 32>}, {pipeline_mode = #tpu.pipeline_mode<synchronous>, transform_indices = @transform_10, window_bounds = array<i64: 1, 32>}, {pipeline_mode = #tpu.pipeline_mode<synchronous>, transform_indices = @transform_11, window_bounds = array<i64: 32, 128>}, {pipeline_mode = #tpu.pipeline_mode<synchronous>, transform_indices = @transform_12, window_bounds = array<i64: 1, 128>}, {pipeline_mode = #tpu.pipeline_mode<synchronous>, transform_indices = @transform_13, window_bounds = array<i64: 128, 32>}, {pipeline_mode = #tpu.pipeline_mode<synchronous>, transform_indices = @transform_14, window_bounds = array<i64: 1, 32>}, {pipeline_mode = #tpu.pipeline_mode<synchronous>, transform_indices = @transform_15, window_bounds = array<i64: 1, 32>}, {pipeline_mode = #tpu.pipeline_mode<synchronous>, transform_indices = @transform_16, window_bounds = array<i64: 1, 32>}, {transform_indices = @transform_17, window_bounds = array<i64: 1, 8, 32>}]} {
    %c0 = arith.constant 0 : index
    %c0_0 = arith.constant 0 : index
    %c0_1 = arith.constant 0 : index
    %0 = vector.load %arg1[%c0, %c0_0, %c0_1] : memref<1x8x32xf32, #tpu.memory_space<vmem>>, vector<1x8x32xf32>
    %1 = vector.shape_cast %0 : vector<1x8x32xf32> to vector<8x32xf32>
    %2 = arith.truncf %1 : vector<8x32xf32> to vector<8x32xbf16>
    %c0_2 = arith.constant 0 : index
    %c0_3 = arith.constant 0 : index
    %3 = vector.load %arg2[%c0_2, %c0_3] : memref<32x32xbf16, #tpu.memory_space<vmem>>, vector<32x32xbf16>
    %cst = arith.constant dense<0.000000e+00> : vector<8x32xf32>
    %4 = tpu.matmul %2, %3, %cst {dimension_numbers = #tpu.dot_dimension_numbers<[1], [0], [0], [1], [0, 0, 1, 1], [], []>} : vector<8x32xbf16>, vector<32x32xbf16>, vector<8x32xf32> -> vector<8x32xf32>
    %c0_4 = arith.constant 0 : index
    %c0_5 = arith.constant 0 : index
    %5 = vector.load %arg3[%c0_4, %c0_5] : memref<1x32xf32, #tpu.memory_space<vmem>>, vector<1x32xf32>
    %6 = vector.broadcast %5 : vector<1x32xf32> to vector<8x32xf32>
    %7 = arith.addf %4, %6 : vector<8x32xf32>
    %c0_6 = arith.constant 0 : index
    %c0_7 = arith.constant 0 : index
    %8 = vector.load %arg4[%c0_6, %c0_7] : memref<32x32xbf16, #tpu.memory_space<vmem>>, vector<32x32xbf16>
    %cst_8 = arith.constant dense<0.000000e+00> : vector<8x32xf32>
    %9 = tpu.matmul %2, %8, %cst_8 {dimension_numbers = #tpu.dot_dimension_numbers<[1], [0], [0], [1], [0, 0, 1, 1], [], []>} : vector<8x32xbf16>, vector<32x32xbf16>, vector<8x32xf32> -> vector<8x32xf32>
    %c0_9 = arith.constant 0 : index
    %c0_10 = arith.constant 0 : index
    %10 = vector.load %arg5[%c0_9, %c0_10] : memref<1x32xf32, #tpu.memory_space<vmem>>, vector<1x32xf32>
    %11 = vector.broadcast %10 : vector<1x32xf32> to vector<8x32xf32>
    %12 = arith.addf %9, %11 : vector<8x32xf32>
    %c0_11 = arith.constant 0 : index
    %c0_12 = arith.constant 0 : index
    %13 = vector.load %arg6[%c0_11, %c0_12] : memref<32x32xbf16, #tpu.memory_space<vmem>>, vector<32x32xbf16>
    %cst_13 = arith.constant dense<0.000000e+00> : vector<8x32xf32>
    %14 = tpu.matmul %2, %13, %cst_13 {dimension_numbers = #tpu.dot_dimension_numbers<[1], [0], [0], [1], [0, 0, 1, 1], [], []>} : vector<8x32xbf16>, vector<32x32xbf16>, vector<8x32xf32> -> vector<8x32xf32>
    %c0_14 = arith.constant 0 : index
    %c0_15 = arith.constant 0 : index
    %15 = vector.load %arg7[%c0_14, %c0_15] : memref<1x32xf32, #tpu.memory_space<vmem>>, vector<1x32xf32>
    %16 = vector.broadcast %15 : vector<1x32xf32> to vector<8x32xf32>
    %17 = arith.addf %14, %16 : vector<8x32xf32>
    %cst_16 = arith.constant 2.500000e-01 : f32
    %18 = vector.broadcast %cst_16 : f32 to vector<8x32xf32>
    %19 = arith.mulf %7, %18 : vector<8x32xf32>
    %20 = tpu.iota {dimensions = array<i32: 0>} : vector<8x8xi32>
    %21 = tpu.iota {dimensions = array<i32: 1>} : vector<8x8xi32>
    %22 = arith.cmpi sge, %20, %21 : vector<8x8xi32>
    %23 = vector.extract_strided_slice %19 {offsets = [0, 0], sizes = [8, 16], strides = [1, 1]} : vector<8x32xf32> to vector<8x16xf32>
    %24 = arith.truncf %23 : vector<8x16xf32> to vector<8x16xbf16>
    %25 = vector.extract_strided_slice %12 {offsets = [0, 0], sizes = [8, 16], strides = [1, 1]} : vector<8x32xf32> to vector<8x16xf32>
    %26 = arith.truncf %25 : vector<8x16xf32> to vector<8x16xbf16>
    %27 = vector.extract_strided_slice %17 {offsets = [0, 0], sizes = [8, 16], strides = [1, 1]} : vector<8x32xf32> to vector<8x16xf32>
    %28 = arith.truncf %27 : vector<8x16xf32> to vector<8x16xbf16>
    %cst_17 = arith.constant dense<0.000000e+00> : vector<8x8xf32>
    %29 = tpu.matmul %24, %26, %cst_17 {dimension_numbers = #tpu.dot_dimension_numbers<[1], [1], [0], [0], [0, 0, 1, 0], [], []>} : vector<8x16xbf16>, vector<8x16xbf16>, vector<8x8xf32> -> vector<8x8xf32>
    %cst_18 = arith.constant -1.000000e+30 : f32
    %30 = vector.broadcast %cst_18 : f32 to vector<8x8xf32>
    %31 = arith.select %22, %29, %30 : vector<8x8xi1>, vector<8x8xf32>
    %cst_19 = arith.constant dense<0xFF800000> : vector<8xf32>
    %32 = vector.multi_reduction <maximumf>, %31, %cst_19 [1] : vector<8x8xf32> to vector<8xf32>
    %33 = vector.shape_cast %32 : vector<8xf32> to vector<8x1xf32>
    %34 = vector.broadcast %33 : vector<8x1xf32> to vector<8x8xf32>
    %35 = arith.subf %31, %34 : vector<8x8xf32>
    %36 = math.exp %35 : vector<8x8xf32>
    %cst_20 = arith.constant dense<0.000000e+00> : vector<8xf32>
    %37 = vector.multi_reduction <add>, %36, %cst_20 [1] : vector<8x8xf32> to vector<8xf32>
    %38 = vector.shape_cast %37 : vector<8xf32> to vector<8x1xf32>
    %39 = tpu.reciprocal %38 {approx = true} : vector<8x1xf32> -> vector<8x1xf32>
    %40 = vector.broadcast %39 : vector<8x1xf32> to vector<8x8xf32>
    %41 = arith.mulf %36, %40 : vector<8x8xf32>
    %42 = arith.truncf %41 : vector<8x8xf32> to vector<8x8xbf16>
    %cst_21 = arith.constant dense<0.000000e+00> : vector<8x16xf32>
    %43 = tpu.matmul %42, %28, %cst_21 {dimension_numbers = #tpu.dot_dimension_numbers<[1], [0], [0], [1], [0, 0, 1, 1], [], []>} : vector<8x8xbf16>, vector<8x16xbf16>, vector<8x16xf32> -> vector<8x16xf32>
    %44 = arith.truncf %43 : vector<8x16xf32> to vector<8x16xbf16>
    %c0_22 = arith.constant 0 : index
    %c0_23 = arith.constant 0 : index
    %45 = vector.load %arg19[%c0_22, %c0_23] : memref<8x32xbf16, #tpu.memory_space<vmem>>, vector<8x16xbf16>
    tpu.vector_store %arg19[%c0_22, %c0_23], %44 {strides = array<i32>} : memref<8x32xbf16, #tpu.memory_space<vmem>>, vector<8x16xbf16>,
    %46 = vector.extract_strided_slice %19 {offsets = [0, 16], sizes = [8, 16], strides = [1, 1]} : vector<8x32xf32> to vector<8x16xf32>
    %47 = arith.truncf %46 : vector<8x16xf32> to vector<8x16xbf16>
    %48 = vector.extract_strided_slice %12 {offsets = [0, 16], sizes = [8, 16], strides = [1, 1]} : vector<8x32xf32> to vector<8x16xf32>
    %49 = arith.truncf %48 : vector<8x16xf32> to vector<8x16xbf16>
    %50 = vector.extract_strided_slice %17 {offsets = [0, 16], sizes = [8, 16], strides = [1, 1]} : vector<8x32xf32> to vector<8x16xf32>
    %51 = arith.truncf %50 : vector<8x16xf32> to vector<8x16xbf16>
    %cst_24 = arith.constant dense<0.000000e+00> : vector<8x8xf32>
    %52 = tpu.matmul %47, %49, %cst_24 {dimension_numbers = #tpu.dot_dimension_numbers<[1], [1], [0], [0], [0, 0, 1, 0], [], []>} : vector<8x16xbf16>, vector<8x16xbf16>, vector<8x8xf32> -> vector<8x8xf32>
    %cst_25 = arith.constant -1.000000e+30 : f32
    %53 = vector.broadcast %cst_25 : f32 to vector<8x8xf32>
    %54 = arith.select %22, %52, %53 : vector<8x8xi1>, vector<8x8xf32>
    %cst_26 = arith.constant dense<0xFF800000> : vector<8xf32>
    %55 = vector.multi_reduction <maximumf>, %54, %cst_26 [1] : vector<8x8xf32> to vector<8xf32>
    %56 = vector.shape_cast %55 : vector<8xf32> to vector<8x1xf32>
    %57 = vector.broadcast %56 : vector<8x1xf32> to vector<8x8xf32>
    %58 = arith.subf %54, %57 : vector<8x8xf32>
    %59 = math.exp %58 : vector<8x8xf32>
    %cst_27 = arith.constant dense<0.000000e+00> : vector<8xf32>
    %60 = vector.multi_reduction <add>, %59, %cst_27 [1] : vector<8x8xf32> to vector<8xf32>
    %61 = vector.shape_cast %60 : vector<8xf32> to vector<8x1xf32>
    %62 = tpu.reciprocal %61 {approx = true} : vector<8x1xf32> -> vector<8x1xf32>
    %63 = vector.broadcast %62 : vector<8x1xf32> to vector<8x8xf32>
    %64 = arith.mulf %59, %63 : vector<8x8xf32>
    %65 = arith.truncf %64 : vector<8x8xf32> to vector<8x8xbf16>
    %cst_28 = arith.constant dense<0.000000e+00> : vector<8x16xf32>
    %66 = tpu.matmul %65, %51, %cst_28 {dimension_numbers = #tpu.dot_dimension_numbers<[1], [0], [0], [1], [0, 0, 1, 1], [], []>} : vector<8x8xbf16>, vector<8x16xbf16>, vector<8x16xf32> -> vector<8x16xf32>
    %67 = arith.truncf %66 : vector<8x16xf32> to vector<8x16xbf16>
    %c0_29 = arith.constant 0 : index
    %c16 = arith.constant 16 : index
    %68 = vector.load %arg19[%c0_29, %c16] : memref<8x32xbf16, #tpu.memory_space<vmem>>, vector<8x16xbf16>
    tpu.vector_store %arg19[%c0_29, %c16], %67 {strides = array<i32>} : memref<8x32xbf16, #tpu.memory_space<vmem>>, vector<8x16xbf16>,
    %c0_30 = arith.constant 0 : index
    %c0_31 = arith.constant 0 : index
    %69 = vector.load %arg19[%c0_30, %c0_31] : memref<8x32xbf16, #tpu.memory_space<vmem>>, vector<8x32xbf16>
    %c0_32 = arith.constant 0 : index
    %c0_33 = arith.constant 0 : index
    %70 = vector.load %arg8[%c0_32, %c0_33] : memref<32x32xbf16, #tpu.memory_space<vmem>>, vector<32x32xbf16>
    %cst_34 = arith.constant dense<0.000000e+00> : vector<8x32xf32>
    %71 = tpu.matmul %69, %70, %cst_34 {dimension_numbers = #tpu.dot_dimension_numbers<[1], [0], [0], [1], [0, 0, 1, 1], [], []>} : vector<8x32xbf16>, vector<32x32xbf16>, vector<8x32xf32> -> vector<8x32xf32>
    %c0_35 = arith.constant 0 : index
    %c0_36 = arith.constant 0 : index
    %72 = vector.load %arg9[%c0_35, %c0_36] : memref<1x32xf32, #tpu.memory_space<vmem>>, vector<1x32xf32>
    %73 = vector.broadcast %72 : vector<1x32xf32> to vector<8x32xf32>
    %74 = arith.addf %71, %73 : vector<8x32xf32>
    %75 = arith.addf %1, %74 : vector<8x32xf32>
    %c0_37 = arith.constant 0 : index
    %c0_38 = arith.constant 0 : index
    %76 = vector.load %arg10[%c0_37, %c0_38] : memref<1x32xf32, #tpu.memory_space<vmem>>, vector<1x32xf32>
    %c0_39 = arith.constant 0 : index
    %c0_40 = arith.constant 0 : index
    %77 = vector.load %arg11[%c0_39, %c0_40] : memref<1x32xf32, #tpu.memory_space<vmem>>, vector<1x32xf32>
    %cst_41 = arith.constant dense<0.000000e+00> : vector<8xf32>
    %78 = vector.multi_reduction <add>, %75, %cst_41 [1] : vector<8x32xf32> to vector<8xf32>
    %79 = vector.shape_cast %78 : vector<8xf32> to vector<8x1xf32>
    %cst_42 = arith.constant 3.200000e+01 : f32
    %80 = vector.broadcast %cst_42 : f32 to vector<8x1xf32>
    %81 = arith.divf %79, %80 : vector<8x1xf32>
    %82 = vector.broadcast %81 : vector<8x1xf32> to vector<8x32xf32>
    %83 = arith.subf %75, %82 : vector<8x32xf32>
    %84 = arith.mulf %83, %83 : vector<8x32xf32>
    %cst_43 = arith.constant dense<0.000000e+00> : vector<8xf32>
    %85 = vector.multi_reduction <add>, %84, %cst_43 [1] : vector<8x32xf32> to vector<8xf32>
    %86 = vector.shape_cast %85 : vector<8xf32> to vector<8x1xf32>
    %cst_44 = arith.constant 3.200000e+01 : f32
    %87 = vector.broadcast %cst_44 : f32 to vector<8x1xf32>
    %88 = arith.divf %86, %87 : vector<8x1xf32>
    %89 = vector.broadcast %81 : vector<8x1xf32> to vector<8x32xf32>
    %90 = arith.subf %75, %89 : vector<8x32xf32>
    %cst_45 = arith.constant 9.99999974E-6 : f32
    %91 = vector.broadcast %cst_45 : f32 to vector<8x1xf32>
    %92 = arith.addf %88, %91 : vector<8x1xf32>
    %93 = math.rsqrt %92 : vector<8x1xf32>
    %94 = vector.broadcast %93 : vector<8x1xf32> to vector<8x32xf32>
    %95 = arith.mulf %90, %94 : vector<8x32xf32>
    %96 = vector.broadcast %76 : vector<1x32xf32> to vector<8x32xf32>
    %97 = arith.mulf %95, %96 : vector<8x32xf32>
    %98 = vector.broadcast %77 : vector<1x32xf32> to vector<8x32xf32>
    %99 = arith.addf %97, %98 : vector<8x32xf32>
    %100 = arith.truncf %99 : vector<8x32xf32> to vector<8x32xbf16>
    %c0_46 = arith.constant 0 : index
    %c0_47 = arith.constant 0 : index
    %101 = vector.load %arg12[%c0_46, %c0_47] : memref<32x128xbf16, #tpu.memory_space<vmem>>, vector<32x128xbf16>
    %cst_48 = arith.constant dense<0.000000e+00> : vector<8x128xf32>
    %102 = tpu.matmul %100, %101, %cst_48 {dimension_numbers = #tpu.dot_dimension_numbers<[1], [0], [0], [1], [0, 0, 1, 1], [], []>} : vector<8x32xbf16>, vector<32x128xbf16>, vector<8x128xf32> -> vector<8x128xf32>
    %c0_49 = arith.constant 0 : index
    %c0_50 = arith.constant 0 : index
    %103 = vector.load %arg13[%c0_49, %c0_50] : memref<1x128xf32, #tpu.memory_space<vmem>>, vector<1x128xf32>
    %104 = vector.broadcast %103 : vector<1x128xf32> to vector<8x128xf32>
    %105 = arith.addf %102, %104 : vector<8x128xf32>
    %cst_51 = arith.constant 0.000000e+00 : f32
    %106 = vector.broadcast %cst_51 : f32 to vector<8x128xf32>
    %107 = arith.maximumf %105, %106 : vector<8x128xf32>
    %108 = arith.truncf %107 : vector<8x128xf32> to vector<8x128xbf16>
    %c0_52 = arith.constant 0 : index
    %c0_53 = arith.constant 0 : index
    %109 = vector.load %arg14[%c0_52, %c0_53] : memref<128x32xbf16, #tpu.memory_space<vmem>>, vector<128x32xbf16>
    %cst_54 = arith.constant dense<0.000000e+00> : vector<8x32xf32>
    %110 = tpu.matmul %108, %109, %cst_54 {dimension_numbers = #tpu.dot_dimension_numbers<[1], [0], [0], [1], [0, 0, 1, 1], [], []>} : vector<8x128xbf16>, vector<128x32xbf16>, vector<8x32xf32> -> vector<8x32xf32>
    %c0_55 = arith.constant 0 : index
    %c0_56 = arith.constant 0 : index
    %111 = vector.load %arg15[%c0_55, %c0_56] : memref<1x32xf32, #tpu.memory_space<vmem>>, vector<1x32xf32>
    %112 = vector.broadcast %111 : vector<1x32xf32> to vector<8x32xf32>
    %113 = arith.addf %110, %112 : vector<8x32xf32>
    %114 = arith.addf %99, %113 : vector<8x32xf32>
    %c0_57 = arith.constant 0 : index
    %c0_58 = arith.constant 0 : index
    %115 = vector.load %arg16[%c0_57, %c0_58] : memref<1x32xf32, #tpu.memory_space<vmem>>, vector<1x32xf32>
    %c0_59 = arith.constant 0 : index
    %c0_60 = arith.constant 0 : index
    %116 = vector.load %arg17[%c0_59, %c0_60] : memref<1x32xf32, #tpu.memory_space<vmem>>, vector<1x32xf32>
    %cst_61 = arith.constant dense<0.000000e+00> : vector<8xf32>
    %117 = vector.multi_reduction <add>, %114, %cst_61 [1] : vector<8x32xf32> to vector<8xf32>
    %118 = vector.shape_cast %117 : vector<8xf32> to vector<8x1xf32>
    %cst_62 = arith.constant 3.200000e+01 : f32
    %119 = vector.broadcast %cst_62 : f32 to vector<8x1xf32>
    %120 = arith.divf %118, %119 : vector<8x1xf32>
    %121 = vector.broadcast %120 : vector<8x1xf32> to vector<8x32xf32>
    %122 = arith.subf %114, %121 : vector<8x32xf32>
    %123 = arith.mulf %122, %122 : vector<8x32xf32>
    %cst_63 = arith.constant dense<0.000000e+00> : vector<8xf32>
    %124 = vector.multi_reduction <add>, %123, %cst_63 [1] : vector<8x32xf32> to vector<8xf32>
    %125 = vector.shape_cast %124 : vector<8xf32> to vector<8x1xf32>
    %cst_64 = arith.constant 3.200000e+01 : f32
    %126 = vector.broadcast %cst_64 : f32 to vector<8x1xf32>
    %127 = arith.divf %125, %126 : vector<8x1xf32>
    %128 = vector.broadcast %120 : vector<8x1xf32> to vector<8x32xf32>
    %129 = arith.subf %114, %128 : vector<8x32xf32>
    %cst_65 = arith.constant 9.99999974E-6 : f32
    %130 = vector.broadcast %cst_65 : f32 to vector<8x1xf32>
    %131 = arith.addf %127, %130 : vector<8x1xf32>
    %132 = math.rsqrt %131 : vector<8x1xf32>
    %133 = vector.broadcast %132 : vector<8x1xf32> to vector<8x32xf32>
    %134 = arith.mulf %129, %133 : vector<8x32xf32>
    %135 = vector.broadcast %115 : vector<1x32xf32> to vector<8x32xf32>
    %136 = arith.mulf %134, %135 : vector<8x32xf32>
    %137 = vector.broadcast %116 : vector<1x32xf32> to vector<8x32xf32>
    %138 = arith.addf %136, %137 : vector<8x32xf32>
    %c0_66 = arith.constant 0 : index
    %c0_67 = arith.constant 0 : index
    %c0_68 = arith.constant 0 : index
    %139 = vector.load %arg18[%c0_66, %c0_67, %c0_68] : memref<1x8x32xf32, #tpu.memory_space<vmem>>, vector<1x8x32xf32>
    %140 = vector.shape_cast %139 : vector<1x8x32xf32> to vector<8x32xf32>
    %141 = vector.shape_cast %138 : vector<8x32xf32> to vector<1x8x32xf32>
    tpu.vector_store %arg18[%c0_66, %c0_67, %c0_68], %141 {strides = array<i32>} : memref<1x8x32xf32, #tpu.memory_space<vmem>>, vector<1x8x32xf32>,
    return
  }
  func.func @transform_0(%arg0: i32) -> (i32, i32, i32) {
    %c0_i32 = arith.constant 0 : i32
    %c0_i32_0 = arith.constant 0 : i32
    %c0_i32_1 = arith.constant 0 : i32
    return %arg0, %c0_i32, %c0_i32_0 : i32, i32, i32
  }
  func.func @transform_1(%arg0: i32) -> (i32, i32) {
    %c0_i32 = arith.constant 0 : i32
    %c0_i32_0 = arith.constant 0 : i32
    %c0_i32_1 = arith.constant 0 : i32
    return %c0_i32, %c0_i32_0 : i32, i32
  }
  func.func @transform_2(%arg0: i32) -> (i32, i32) {
    %c0_i32 = arith.constant 0 : i32
    %c0_i32_0 = arith.constant 0 : i32
    %c0_i32_1 = arith.constant 0 : i32
    return %c0_i32, %c0_i32_0 : i32, i32
  }
  func.func @transform_3(%arg0: i32) -> (i32, i32) {
    %c0_i32 = arith.constant 0 : i32
    %c0_i32_0 = arith.constant 0 : i32
    %c0_i32_1 = arith.constant 0 : i32
    return %c0_i32, %c0_i32_0 : i32, i32
  }
  func.func @transform_4(%arg0: i32) -> (i32, i32) {
    %c0_i32 = arith.constant 0 : i32
    %c0_i32_0 = arith.constant 0 : i32
    %c0_i32_1 = arith.constant 0 : i32
    return %c0_i32, %c0_i32_0 : i32, i32
  }
  func.func @transform_5(%arg0: i32) -> (i32, i32) {
    %c0_i32 = arith.constant 0 : i32
    %c0_i32_0 = arith.constant 0 : i32
    %c0_i32_1 = arith.constant 0 : i32
    return %c0_i32, %c0_i32_0 : i32, i32
  }
  func.func @transform_6(%arg0: i32) -> (i32, i32) {
    %c0_i32 = arith.constant 0 : i32
    %c0_i32_0 = arith.constant 0 : i32
    %c0_i32_1 = arith.constant 0 : i32
    return %c0_i32, %c0_i32_0 : i32, i32
  }
  func.func @transform_7(%arg0: i32) -> (i32, i32) {
    %c0_i32 = arith.constant 0 : i32
    %c0_i32_0 = arith.constant 0 : i32
    %c0_i32_1 = arith.constant 0 : i32
    return %c0_i32, %c0_i32_0 : i32, i32
  }
  func.func @transform_8(%arg0: i32) -> (i32, i32) {
    %c0_i32 = arith.constant 0 : i32
    %c0_i32_0 = arith.constant 0 : i32
    %c0_i32_1 = arith.constant 0 : i32
    return %c0_i32, %c0_i32_0 : i32, i32
  }
  func.func @transform_9(%arg0: i32) -> (i32, i32) {
    %c0_i32 = arith.constant 0 : i32
    %c0_i32_0 = arith.constant 0 : i32
    %c0_i32_1 = arith.constant 0 : i32
    return %c0_i32, %c0_i32_0 : i32, i32
  }
  func.func @transform_10(%arg0: i32) -> (i32, i32) {
    %c0_i32 = arith.constant 0 : i32
    %c0_i32_0 = arith.constant 0 : i32
    %c0_i32_1 = arith.constant 0 : i32
    return %c0_i32, %c0_i32_0 : i32, i32
  }
  func.func @transform_11(%arg0: i32) -> (i32, i32) {
    %c0_i32 = arith.constant 0 : i32
    %c0_i32_0 = arith.constant 0 : i32
    %c0_i32_1 = arith.constant 0 : i32
    return %c0_i32, %c0_i32_0 : i32, i32
  }
  func.func @transform_12(%arg0: i32) -> (i32, i32) {
    %c0_i32 = arith.constant 0 : i32
    %c0_i32_0 = arith.constant 0 : i32
    %c0_i32_1 = arith.constant 0 : i32
    return %c0_i32, %c0_i32_0 : i32, i32
  }
  func.func @transform_13(%arg0: i32) -> (i32, i32) {
    %c0_i32 = arith.constant 0 : i32
    %c0_i32_0 = arith.constant 0 : i32
    %c0_i32_1 = arith.constant 0 : i32
    return %c0_i32, %c0_i32_0 : i32, i32
  }
  func.func @transform_14(%arg0: i32) -> (i32, i32) {
    %c0_i32 = arith.constant 0 : i32
    %c0_i32_0 = arith.constant 0 : i32
    %c0_i32_1 = arith.constant 0 : i32
    return %c0_i32, %c0_i32_0 : i32, i32
  }
  func.func @transform_15(%arg0: i32) -> (i32, i32) {
    %c0_i32 = arith.constant 0 : i32
    %c0_i32_0 = arith.constant 0 : i32
    %c0_i32_1 = arith.constant 0 : i32
    return %c0_i32, %c0_i32_0 : i32, i32
  }
  func.func @transform_16(%arg0: i32) -> (i32, i32) {
    %c0_i32 = arith.constant 0 : i32
    %c0_i32_0 = arith.constant 0 : i32
    %c0_i32_1 = arith.constant 0 : i32
    return %c0_i32, %c0_i32_0 : i32, i32
  }
  func.func @transform_17(%arg0: i32) -> (i32, i32, i32) {
    %c0_i32 = arith.constant 0 : i32
    %c0_i32_0 = arith.constant 0 : i32
    %c0_i32_1 = arith.constant 0 : i32
    return %arg0, %c0_i32, %c0_i32_0 : i32, i32, i32
  }
}

</mosaic_0001>

<llo_original>
// kernel: tpu_custom_call.1
$region0: #{tpu_custom_call.1}
  #allocation0 [shape = 'u32[]', space=smem, size = 0x4, offset = 0x4, fixed_abs, tag = 'smem constant byte address 0x4 - core index']
  #allocation1 [shape = 'u32[72,128]{1,0:T(1,128)}', space=vmem, size = 0x9000, scoped, tag = 'internal scratch']
  #allocation2 [shape = 'bf16[8,32]{1,0:T(8,128)(2,1)}', space=vmem, size = 0x800, scoped, tag = 'scratch operand']
  %s0 = inlined_call_operand.vmem [shape: f32[2,8,32], index: 0, kind: input, shape index: {}]
  %s1 = inlined_call_operand.vmem [shape: bf16[32,32], index: 1, kind: input, shape index: {}]
  %s2 = inlined_call_operand.vmem [shape: f32[1,32], index: 2, kind: input, shape index: {}]
  %s3 = inlined_call_operand.vmem [shape: bf16[32,32], index: 3, kind: input, shape index: {}]
  %s4 = inlined_call_operand.vmem [shape: f32[1,32], index: 4, kind: input, shape index: {}]
  %s5 = inlined_call_operand.vmem [shape: bf16[32,32], index: 5, kind: input, shape index: {}]
  %s6 = inlined_call_operand.vmem [shape: f32[1,32], index: 6, kind: input, shape index: {}]
  %s7 = inlined_call_operand.vmem [shape: bf16[32,32], index: 7, kind: input, shape index: {}]
  %s8 = inlined_call_operand.vmem [shape: f32[1,32], index: 8, kind: input, shape index: {}]
  %s9 = inlined_call_operand.vmem [shape: f32[1,32], index: 9, kind: input, shape index: {}]
  %s10 = inlined_call_operand.vmem [shape: f32[1,32], index: 10, kind: input, shape index: {}]
  %s11 = inlined_call_operand.hbm [shape: bf16[32,128], index: 11, kind: input, shape index: {}]
  %s12 = inlined_call_operand.vmem [shape: f32[1,128], index: 12, kind: input, shape index: {}]
  %s13 = inlined_call_operand.vmem [shape: bf16[128,32], index: 13, kind: input, shape index: {}]
  %s14 = inlined_call_operand.vmem [shape: f32[1,32], index: 14, kind: input, shape index: {}]
  %s15 = inlined_call_operand.vmem [shape: f32[1,32], index: 15, kind: input, shape index: {}]
  %s16 = inlined_call_operand.vmem [shape: f32[1,32], index: 16, kind: input, shape index: {}]
  %s17 = inlined_call_operand.hbm [shape: f32[2,8,32], index: 17, kind: output, shape index: {}]
  %s18 = sld [smem:[#allocation0]]
  $region105: #{tpu_custom_call.1} parent=0
    _
  %s20 = ssub.s32 1, %s18
  %s21 = scalar_select 0, %s20, %s18
  $region1: #{tpu_custom_call.1} parent=0
    #allocation3 [shape = 'u8[8192]{0}', space=vmem, size = 0x2000, scoped, tag = 'input window, operand 11, single buffered']
    #allocation4 [shape = 's32[2]{0}', space=sflag, size = 0x8, scoped, tag = 'scoped memory for tpu_custom_call.1']
    #allocation5 [shape = 's32[2]{0}', space=sflag, size = 0x8, scoped, tag = 'scoped memory for tpu_custom_call.1']
    #allocation6 [shape = 'u8[8192]{0}', space=vmem, size = 0x2000, scoped, tag = 'output window, operand 0']
    %22 = vsyncpa [#allocation4], 0
    %23 = vsyncpa [#allocation5], 0
    %s24 = scalar_lea.sflag [#allocation5], 1
    %25 = vsyncpa %s24, 0
    loop: start=0, step=1, limit=4
    $region2: #{tpu_custom_call.1} parent=1 // loop_pre_header
      _
    $region3: #{tpu_custom_call.1} parent=1 // loop_header
      %s27 = sphi 0, %s31
      %p28 = scmp.ge.s32.totalorder %s27, 4
      %s37 = sphi 0, %s39
      %s40 = sphi 0, %s37
      %s41 = sphi 0, %s40
      %s57 = sphi 0, %s41
      %s61 = sphi 0, %s61
      %s63 = sphi 0, %s61
      %s64 = sphi 0, %s63
      %s78 = sphi 0, %s64
      %s82 = sphi 0, %s82
      %s84 = sphi 0, %s82
      %s85 = sphi 0, %s84
      %s99 = sphi 0, %s85
      %s103 = sphi 0, %s103
      %s105 = sphi 0, %s103
      %s106 = sphi 0, %s105
      %s120 = sphi 0, %s106
      %s124 = sphi 0, %s124
      %s126 = sphi 0, %s124
      %s127 = sphi 0, %s126
      %s141 = sphi 0, %s127
      %s145 = sphi 0, %s145
      %s147 = sphi 0, %s145
      %s148 = sphi 0, %s147
      %s162 = sphi 0, %s148
      %s166 = sphi 0, %s166
      %s168 = sphi 0, %s166
      %s169 = sphi 0, %s168
      %s183 = sphi 0, %s169
      %s187 = sphi 0, %s187
      %s189 = sphi 0, %s187
      %s190 = sphi 0, %s189
      %s204 = sphi 0, %s190
      %s208 = sphi 0, %s208
      %s210 = sphi 0, %s208
      %s211 = sphi 0, %s210
      %s225 = sphi 0, %s211
      %s229 = sphi 0, %s229
      %s231 = sphi 0, %s229
      %s232 = sphi 0, %s231
      %s246 = sphi 0, %s232
      %s250 = sphi 0, %s250
      %s252 = sphi 0, %s250
      %s253 = sphi 0, %s252
      %s267 = sphi 0, %s253
      %s271 = sphi 0, %s271
      %s273 = sphi 0, %s271
      %s274 = sphi 0, %s273
      %s288 = sphi 0, %s274
      %s292 = sphi 0, %s292
      %s294 = sphi 0, %s292
      %s295 = sphi 0, %s294
      %s309 = sphi 0, %s295
      %s313 = sphi 0, %s313
      %s315 = sphi 0, %s313
      %s316 = sphi 0, %s315
      %s330 = sphi 0, %s316
      %s334 = sphi 0, %s334
      %s336 = sphi 0, %s334
      %s337 = sphi 0, %s336
      %s351 = sphi 0, %s337
      %s355 = sphi 0, %s355
      %s357 = sphi 0, %s355
      %s358 = sphi 0, %s357
      %s372 = sphi 0, %s358
      %s376 = sphi 0, %s376
      %s378 = sphi 0, %s376
      %s379 = sphi 0, %s378
      %s393 = sphi 0, %s379
      %s399 = sphi 0, %s401
      %s402 = sphi 0, %s399
      %s403 = sphi 0, %s402
      %s419 = sphi 0, %s403
    $region4: #{tpu_custom_call.1} parent=1 // loop_header_branch
      %30 = sbr.rel (%p28) target = $region8
    $region5: #{tpu_custom_call.1} parent=1 // loop_body
      %s32 = ssub.s32 %s27, 1
      %s33 = ssub.s32 %s27, 2
      %s34 = sadd.s32 %s27, 1
      %s35 = ssub.s32 %s27, %s34
      %p36 = scmp.eq.s32.totalorder %s35, 0
      %s38 = sadd.s32 %s37, 1
      %s39 = scalar_select %p36, %s37, %s38
      %p42 = pneg %p36
      %p43 = scmp.eq.s32.totalorder %s27, 1
      %p44 = por %p42, %p43
      %p45 = scmp.ne.s32.totalorder %s37, %s40
      %p46 = scmp.eq.s32.totalorder %s27, 0
      %p47 = por %p45, %p46
      %p48 = scmp.ne.s32.totalorder %s37, %s40
      %p49 = scmp.eq.s32.totalorder %s32, 1
      %p50 = por %p48, %p49
      %p51 = scmp.ne.s32.totalorder %s40, %s41
      %p52 = scmp.eq.s32.totalorder %s32, 0
      %p53 = por %p51, %p52
      %p54 = scmp.ne.s32.totalorder %s40, %s41
      %p55 = scmp.eq.s32.totalorder %s33, 1
      %p56 = por %p54, %p55
      %p58 = scmp.ne.s32.totalorder %s41, %s57
      %p59 = scmp.eq.s32.totalorder %s33, 0
      %p60 = por %p58, %p59
      %s62 = sadd.s32 %s61, 1
      %p65 = scmp.eq.s32.totalorder %s27, 1
      %p66 = scmp.ne.s32.totalorder %s61, %s63
      %p67 = scmp.eq.s32.totalorder %s27, 0
      %p68 = por %p66, %p67
      %p69 = scmp.ne.s32.totalorder %s61, %s63
      %p70 = scmp.eq.s32.totalorder %s32, 1
      %p71 = por %p69, %p70
      %p72 = scmp.ne.s32.totalorder %s63, %s64
      %p73 = scmp.eq.s32.totalorder %s32, 0
      %p74 = por %p72, %p73
      %p75 = scmp.ne.s32.totalorder %s63, %s64
      %p76 = scmp.eq.s32.totalorder %s33, 1
      %p77 = por %p75, %p76
      %p79 = scmp.ne.s32.totalorder %s64, %s78
      %p80 = scmp.eq.s32.totalorder %s33, 0
      %p81 = por %p79, %p80
      %s83 = sadd.s32 %s82, 1
      %p86 = scmp.eq.s32.totalorder %s27, 1
      %p87 = scmp.ne.s32.totalorder %s82, %s84
      %p88 = scmp.eq.s32.totalorder %s27, 0
      %p89 = por %p87, %p88
      %p90 = scmp.ne.s32.totalorder %s82, %s84
      %p91 = scmp.eq.s32.totalorder %s32, 1
      %p92 = por %p90, %p91
      %p93 = scmp.ne.s32.totalorder %s84, %s85
      %p94 = scmp.eq.s32.totalorder %s32, 0
      %p95 = por %p93, %p94
      %p96 = scmp.ne.s32.totalorder %s84, %s85
      %p97 = scmp.eq.s32.totalorder %s33, 1
      %p98 = por %p96, %p97
      %p100 = scmp.ne.s32.totalorder %s85, %s99
      %p101 = scmp.eq.s32.totalorder %s33, 0
      %p102 = por %p100, %p101
      %s104 = sadd.s32 %s103, 1
      %p107 = scmp.eq.s32.totalorder %s27, 1
      %p108 = scmp.ne.s32.totalorder %s103, %s105
      %p109 = scmp.eq.s32.totalorder %s27, 0
      %p110 = por %p108, %p109
      %p111 = scmp.ne.s32.totalorder %s103, %s105
      %p112 = scmp.eq.s32.totalorder %s32, 1
      %p113 = por %p111, %p112
      %p114 = scmp.ne.s32.totalorder %s105, %s106
      %p115 = scmp.eq.s32.totalorder %s32, 0
      %p116 = por %p114, %p115
      %p117 = scmp.ne.s32.totalorder %s105, %s106
      %p118 = scmp.eq.s32.totalorder %s33, 1
      %p119 = por %p117, %p118
      %p121 = scmp.ne.s32.totalorder %s106, %s120
      %p122 = scmp.eq.s32.totalorder %s33, 0
      %p123 = por %p121, %p122
      %s125 = sadd.s32 %s124, 1
      %p128 = scmp.eq.s32.totalorder %s27, 1
      %p129 = scmp.ne.s32.totalorder %s124, %s126
      %p130 = scmp.eq.s32.totalorder %s27, 0
      %p131 = por %p129, %p130
      %p132 = scmp.ne.s32.totalorder %s124, %s126
      %p133 = scmp.eq.s32.totalorder %s32, 1
      %p134 = por %p132, %p133
      %p135 = scmp.ne.s32.totalorder %s126, %s127
      %p136 = scmp.eq.s32.totalorder %s32, 0
      %p137 = por %p135, %p136
      %p138 = scmp.ne.s32.totalorder %s126, %s127
      %p139 = scmp.eq.s32.totalorder %s33, 1
      %p140 = por %p138, %p139
      %p142 = scmp.ne.s32.totalorder %s127, %s141
      %p143 = scmp.eq.s32.totalorder %s33, 0
      %p144 = por %p142, %p143
      %s146 = sadd.s32 %s145, 1
      %p149 = scmp.eq.s32.totalorder %s27, 1
      %p150 = scmp.ne.s32.totalorder %s145, %s147
      %p151 = scmp.eq.s32.totalorder %s27, 0
      %p152 = por %p150, %p151
      %p153 = scmp.ne.s32.totalorder %s145, %s147
      %p154 = scmp.eq.s32.totalorder %s32, 1
      %p155 = por %p153, %p154
      %p156 = scmp.ne.s32.totalorder %s147, %s148
      %p157 = scmp.eq.s32.totalorder %s32, 0
      %p158 = por %p156, %p157
      %p159 = scmp.ne.s32.totalorder %s147, %s148
      %p160 = scmp.eq.s32.totalorder %s33, 1
      %p161 = por %p159, %p160
      %p163 = scmp.ne.s32.totalorder %s148, %s162
      %p164 = scmp.eq.s32.totalorder %s33, 0
      %p165 = por %p163, %p164
      %s167 = sadd.s32 %s166, 1
      %p170 = scmp.eq.s32.totalorder %s27, 1
      %p171 = scmp.ne.s32.totalorder %s166, %s168
      %p172 = scmp.eq.s32.totalorder %s27, 0
      %p173 = por %p171, %p172
      %p174 = scmp.ne.s32.totalorder %s166, %s168
      %p175 = scmp.eq.s32.totalorder %s32, 1
      %p176 = por %p174, %p175
      %p177 = scmp.ne.s32.totalorder %s168, %s169
      %p178 = scmp.eq.s32.totalorder %s32, 0
      %p179 = por %p177, %p178
      %p180 = scmp.ne.s32.totalorder %s168, %s169
      %p181 = scmp.eq.s32.totalorder %s33, 1
      %p182 = por %p180, %p181
      %p184 = scmp.ne.s32.totalorder %s169, %s183
      %p185 = scmp.eq.s32.totalorder %s33, 0
      %p186 = por %p184, %p185
      %s188 = sadd.s32 %s187, 1
      %p191 = scmp.eq.s32.totalorder %s27, 1
      %p192 = scmp.ne.s32.totalorder %s187, %s189
      %p193 = scmp.eq.s32.totalorder %s27, 0
      %p194 = por %p192, %p193
      %p195 = scmp.ne.s32.totalorder %s187, %s189
      %p196 = scmp.eq.s32.totalorder %s32, 1
      %p197 = por %p195, %p196
      %p198 = scmp.ne.s32.totalorder %s189, %s190
      %p199 = scmp.eq.s32.totalorder %s32, 0
      %p200 = por %p198, %p199
      %p201 = scmp.ne.s32.totalorder %s189, %s190
      %p202 = scmp.eq.s32.totalorder %s33, 1
      %p203 = por %p201, %p202
      %p205 = scmp.ne.s32.totalorder %s190, %s204
      %p206 = scmp.eq.s32.totalorder %s33, 0
      %p207 = por %p205, %p206
      %s209 = sadd.s32 %s208, 1
      %p212 = scmp.eq.s32.totalorder %s27, 1
      %p213 = scmp.ne.s32.totalorder %s208, %s210
      %p214 = scmp.eq.s32.totalorder %s27, 0
      %p215 = por %p213, %p214
      %p216 = scmp.ne.s32.totalorder %s208, %s210
      %p217 = scmp.eq.s32.totalorder %s32, 1
      %p218 = por %p216, %p217
      %p219 = scmp.ne.s32.totalorder %s210, %s211
      %p220 = scmp.eq.s32.totalorder %s32, 0
      %p221 = por %p219, %p220
      %p222 = scmp.ne.s32.totalorder %s210, %s211
      %p223 = scmp.eq.s32.totalorder %s33, 1
      %p224 = por %p222, %p223
      %p226 = scmp.ne.s32.totalorder %s211, %s225
      %p227 = scmp.eq.s32.totalorder %s33, 0
      %p228 = por %p226, %p227
      %s230 = sadd.s32 %s229, 1
      %p233 = scmp.eq.s32.totalorder %s27, 1
      %p234 = scmp.ne.s32.totalorder %s229, %s231
      %p235 = scmp.eq.s32.totalorder %s27, 0
      %p236 = por %p234, %p235
      %p237 = scmp.ne.s32.totalorder %s229, %s231
      %p238 = scmp.eq.s32.totalorder %s32, 1
      %p239 = por %p237, %p238
      %p240 = scmp.ne.s32.totalorder %s231, %s232
      %p241 = scmp.eq.s32.totalorder %s32, 0
      %p242 = por %p240, %p241
      %p243 = scmp.ne.s32.totalorder %s231, %s232
      %p244 = scmp.eq.s32.totalorder %s33, 1
      %p245 = por %p243, %p244
      %p247 = scmp.ne.s32.totalorder %s232, %s246
      %p248 = scmp.eq.s32.totalorder %s33, 0
      %p249 = por %p247, %p248
      %s251 = sadd.s32 %s250, 1
      %p254 = scmp.eq.s32.totalorder %s27, 1
      %p255 = scmp.ne.s32.totalorder %s250, %s252
      %p256 = scmp.eq.s32.totalorder %s27, 0
      %p257 = por %p255, %p256
      %p258 = scmp.ne.s32.totalorder %s250, %s252
      %p259 = scmp.eq.s32.totalorder %s32, 1
      %p260 = por %p258, %p259
      %p261 = scmp.ne.s32.totalorder %s252, %s253
      %p262 = scmp.eq.s32.totalorder %s32, 0
      %p263 = por %p261, %p262
      %p264 = scmp.ne.s32.totalorder %s252, %s253
      %p265 = scmp.eq.s32.totalorder %s33, 1
      %p266 = por %p264, %p265
      %p268 = scmp.ne.s32.totalorder %s253, %s267
      %p269 = scmp.eq.s32.totalorder %s33, 0
      %p270 = por %p268, %p269
      %s272 = sadd.s32 %s271, 1
      %p275 = scmp.eq.s32.totalorder %s27, 1
      %p276 = scmp.ne.s32.totalorder %s271, %s273
      %p277 = scmp.eq.s32.totalorder %s27, 0
      %p278 = por %p276, %p277
      %p279 = scmp.ne.s32.totalorder %s271, %s273
      %p280 = scmp.eq.s32.totalorder %s32, 1
      %p281 = por %p279, %p280
      %p282 = scmp.ne.s32.totalorder %s273, %s274
      %p283 = scmp.eq.s32.totalorder %s32, 0
      %p284 = por %p282, %p283
      %p285 = scmp.ne.s32.totalorder %s273, %s274
      %p286 = scmp.eq.s32.totalorder %s33, 1
      %p287 = por %p285, %p286
      %p289 = scmp.ne.s32.totalorder %s274, %s288
      %p290 = scmp.eq.s32.totalorder %s33, 0
      %p291 = por %p289, %p290
      %s293 = sadd.s32 %s292, 1
      %p296 = scmp.eq.s32.totalorder %s27, 1
      %p297 = scmp.ne.s32.totalorder %s292, %s294
      %p298 = scmp.eq.s32.totalorder %s27, 0
      %p299 = por %p297, %p298
      %p300 = scmp.ne.s32.totalorder %s292, %s294
      %p301 = scmp.eq.s32.totalorder %s32, 1
      %p302 = por %p300, %p301
      %p303 = scmp.ne.s32.totalorder %s294, %s295
      %p304 = scmp.eq.s32.totalorder %s32, 0
      %p305 = por %p303, %p304
      %p306 = scmp.ne.s32.totalorder %s294, %s295
      %p307 = scmp.eq.s32.totalorder %s33, 1
      %p308 = por %p306, %p307
      %p310 = scmp.ne.s32.totalorder %s295, %s309
      %p311 = scmp.eq.s32.totalorder %s33, 0
      %p312 = por %p310, %p311
      %s314 = sadd.s32 %s313, 1
      %p317 = scmp.eq.s32.totalorder %s27, 1
      %p318 = scmp.ne.s32.totalorder %s313, %s315
      %p319 = scmp.eq.s32.totalorder %s27, 0
      %p320 = por %p318, %p319
      %p321 = scmp.ne.s32.totalorder %s313, %s315
      %p322 = scmp.eq.s32.totalorder %s32, 1
      %p323 = por %p321, %p322
      %p324 = scmp.ne.s32.totalorder %s315, %s316
      %p325 = scmp.eq.s32.totalorder %s32, 0
      %p326 = por %p324, %p325
      %p327 = scmp.ne.s32.totalorder %s315, %s316
      %p328 = scmp.eq.s32.totalorder %s33, 1
      %p329 = por %p327, %p328
      %p331 = scmp.ne.s32.totalorder %s316, %s330
      %p332 = scmp.eq.s32.totalorder %s33, 0
      %p333 = por %p331, %p332
      %s335 = sadd.s32 %s334, 1
      %p338 = scmp.eq.s32.totalorder %s27, 1
      %p339 = scmp.ne.s32.totalorder %s334, %s336
      %p340 = scmp.eq.s32.totalorder %s27, 0
      %p341 = por %p339, %p340
      %p342 = scmp.ne.s32.totalorder %s334, %s336
      %p343 = scmp.eq.s32.totalorder %s32, 1
      %p344 = por %p342, %p343
      %p345 = scmp.ne.s32.totalorder %s336, %s337
      %p346 = scmp.eq.s32.totalorder %s32, 0
      %p347 = por %p345, %p346
      %p348 = scmp.ne.s32.totalorder %s336, %s337
      %p349 = scmp.eq.s32.totalorder %s33, 1
      %p350 = por %p348, %p349
      %p352 = scmp.ne.s32.totalorder %s337, %s351
      %p353 = scmp.eq.s32.totalorder %s33, 0
      %p354 = por %p352, %p353
      %s356 = sadd.s32 %s355, 1
      %p359 = scmp.eq.s32.totalorder %s27, 1
      %p360 = scmp.ne.s32.totalorder %s355, %s357
      %p361 = scmp.eq.s32.totalorder %s27, 0
      %p362 = por %p360, %p361
      %p363 = scmp.ne.s32.totalorder %s355, %s357
      %p364 = scmp.eq.s32.totalorder %s32, 1
      %p365 = por %p363, %p364
      %p366 = scmp.ne.s32.totalorder %s357, %s358
      %p367 = scmp.eq.s32.totalorder %s32, 0
      %p368 = por %p366, %p367
      %p369 = scmp.ne.s32.totalorder %s357, %s358
      %p370 = scmp.eq.s32.totalorder %s33, 1
      %p371 = por %p369, %p370
      %p373 = scmp.ne.s32.totalorder %s358, %s372
      %p374 = scmp.eq.s32.totalorder %s33, 0
      %p375 = por %p373, %p374
      %s377 = sadd.s32 %s376, 1
      %p380 = scmp.eq.s32.totalorder %s27, 1
      %p381 = scmp.ne.s32.totalorder %s376, %s378
      %p382 = scmp.eq.s32.totalorder %s27, 0
      %p383 = por %p381, %p382
      %p384 = scmp.ne.s32.totalorder %s376, %s378
      %p385 = scmp.eq.s32.totalorder %s32, 1
      %p386 = por %p384, %p385
      %p387 = scmp.ne.s32.totalorder %s378, %s379
      %p388 = scmp.eq.s32.totalorder %s32, 0
      %p389 = por %p387, %p388
      %p390 = scmp.ne.s32.totalorder %s378, %s379
      %p391 = scmp.eq.s32.totalorder %s33, 1
      %p392 = por %p390, %p391
      %p394 = scmp.ne.s32.totalorder %s379, %s393
      %p395 = scmp.eq.s32.totalorder %s33, 0
      %p396 = por %p394, %p395
      %s397 = ssub.s32 %s27, %s34
      %p398 = scmp.eq.s32.totalorder %s397, 0
      %s400 = sadd.s32 %s399, 1
      %s401 = scalar_select %p398, %s399, %s400
      %p404 = pneg %p398
      %p405 = scmp.eq.s32.totalorder %s27, 1
      %p406 = por %p404, %p405
      %p407 = scmp.ne.s32.totalorder %s399, %s402
      %p408 = scmp.eq.s32.totalorder %s27, 0
      %p409 = por %p407, %p408
      %p410 = scmp.ne.s32.totalorder %s399, %s402
      %p411 = scmp.eq.s32.totalorder %s32, 1
      %p412 = por %p410, %p411
      %p413 = scmp.ne.s32.totalorder %s402, %s403
      %p414 = scmp.eq.s32.totalorder %s32, 0
      %p415 = por %p413, %p414
      %p416 = scmp.ne.s32.totalorder %s402, %s403
      %p417 = scmp.eq.s32.totalorder %s33, 1
      %p418 = por %p416, %p417
      %p420 = scmp.ne.s32.totalorder %s403, %s419
      %p421 = scmp.eq.s32.totalorder %s33, 0
      %p422 = por %p420, %p421
      %p423 = scmp.le.s32.totalorder 1, %s27
      %p424 = scmp.lt.s32.totalorder %s27, 3
      %p425 = pnand %p423, %p424
      %p426 = pneg %p425
      // Predicated region
      $region9: #{tpu_custom_call.1} parent=5 // pred_check
        _
      $region10: #{tpu_custom_call.1} parent=5 // pred_check_branch
        %428 = sbr.rel (%p425) target = $region12
      $region11: #{tpu_custom_call.1} parent=5 // pred_region
        %s429 = ssub.s32 %s27, 1
        // Predicated region
        $region13: #{tpu_custom_call.1} parent=11 // pred_check
          %p430 = pneg %p74
        $region14: #{tpu_custom_call.1} parent=11 // pred_check_branch
          %432 = sbr.rel (%p430) target = $region16
        $region15: #{tpu_custom_call.1} parent=11 // pred_region
          _
        $region16: #{tpu_custom_call.1} parent=11 // pred_fallthru
          _
        // Predicated region
        $region17: #{tpu_custom_call.1} parent=11 // pred_check
          %p433 = pneg %p95
        $region18: #{tpu_custom_call.1} parent=11 // pred_check_branch
          %435 = sbr.rel (%p433) target = $region20
        $region19: #{tpu_custom_call.1} parent=11 // pred_region
          _
        $region20: #{tpu_custom_call.1} parent=11 // pred_fallthru
          _
        // Predicated region
        $region21: #{tpu_custom_call.1} parent=11 // pred_check
          %p436 = pneg %p116
        $region22: #{tpu_custom_call.1} parent=11 // pred_check_branch
          %438 = sbr.rel (%p436) target = $region24
        $region23: #{tpu_custom_call.1} parent=11 // pred_region
          _
        $region24: #{tpu_custom_call.1} parent=11 // pred_fallthru
          _
        // Predicated region
        $region25: #{tpu_custom_call.1} parent=11 // pred_check
          %p439 = pneg %p137
        $region26: #{tpu_custom_call.1} parent=11 // pred_check_branch
          %441 = sbr.rel (%p439) target = $region28
        $region27: #{tpu_custom_call.1} parent=11 // pred_region
          _
        $region28: #{tpu_custom_call.1} parent=11 // pred_fallthru
          _
        // Predicated region
        $region29: #{tpu_custom_call.1} parent=11 // pred_check
          %p442 = pneg %p158
        $region30: #{tpu_custom_call.1} parent=11 // pred_check_branch
          %444 = sbr.rel (%p442) target = $region32
        $region31: #{tpu_custom_call.1} parent=11 // pred_region
          _
        $region32: #{tpu_custom_call.1} parent=11 // pred_fallthru
          _
        // Predicated region
        $region33: #{tpu_custom_call.1} parent=11 // pred_check
          %p445 = pneg %p179
        $region34: #{tpu_custom_call.1} parent=11 // pred_check_branch
          %447 = sbr.rel (%p445) target = $region36
        $region35: #{tpu_custom_call.1} parent=11 // pred_region
          _
        $region36: #{tpu_custom_call.1} parent=11 // pred_fallthru
          _
        // Predicated region
        $region37: #{tpu_custom_call.1} parent=11 // pred_check
          %p448 = pneg %p200
        $region38: #{tpu_custom_call.1} parent=11 // pred_check_branch
          %450 = sbr.rel (%p448) target = $region40
        $region39: #{tpu_custom_call.1} parent=11 // pred_region
          _
        $region40: #{tpu_custom_call.1} parent=11 // pred_fallthru
          _
        // Predicated region
        $region41: #{tpu_custom_call.1} parent=11 // pred_check
          %p451 = pneg %p221
        $region42: #{tpu_custom_call.1} parent=11 // pred_check_branch
          %453 = sbr.rel (%p451) target = $region44
        $region43: #{tpu_custom_call.1} parent=11 // pred_region
          _
        $region44: #{tpu_custom_call.1} parent=11 // pred_fallthru
          _
        // Predicated region
        $region45: #{tpu_custom_call.1} parent=11 // pred_check
          %p454 = pneg %p242
        $region46: #{tpu_custom_call.1} parent=11 // pred_check_branch
          %456 = sbr.rel (%p454) target = $region48
        $region47: #{tpu_custom_call.1} parent=11 // pred_region
          _
        $region48: #{tpu_custom_call.1} parent=11 // pred_fallthru
          _
        // Predicated region
        $region49: #{tpu_custom_call.1} parent=11 // pred_check
          %p457 = pneg %p263
        $region50: #{tpu_custom_call.1} parent=11 // pred_check_branch
          %459 = sbr.rel (%p457) target = $region52
        $region51: #{tpu_custom_call.1} parent=11 // pred_region
          _
        $region52: #{tpu_custom_call.1} parent=11 // pred_fallthru
          _
        // Predicated region
        $region53: #{tpu_custom_call.1} parent=11 // pred_check
          %p460 = pneg %p284
        $region54: #{tpu_custom_call.1} parent=11 // pred_check_branch
          %462 = sbr.rel (%p460) target = $region56
        $region55: #{tpu_custom_call.1} parent=11 // pred_region
          %464 = vsyncadd [#allocation4], 0
          %s465 = sshll.u32 %s11, 4
          %s466 = int_to_ptr.hbm [resolvable:$true] %s465
          %s467 = sshll.u32 [#allocation3], 4
          %s468 = int_to_ptr.vmem [resolvable:$true] %s467
          %473 = dma.hbm_to_vmem [thread:$0]  %s466, 256, %s468, [#allocation4], 64, 64, 4
        $region56: #{tpu_custom_call.1} parent=11 // pred_fallthru
          _
        // Predicated region
        $region57: #{tpu_custom_call.1} parent=11 // pred_check
          %p474 = pneg %p305
        $region58: #{tpu_custom_call.1} parent=11 // pred_check_branch
          %476 = sbr.rel (%p474) target = $region60
        $region59: #{tpu_custom_call.1} parent=11 // pred_region
          _
        $region60: #{tpu_custom_call.1} parent=11 // pred_fallthru
          _
        // Predicated region
        $region61: #{tpu_custom_call.1} parent=11 // pred_check
          %p477 = pneg %p326
        $region62: #{tpu_custom_call.1} parent=11 // pred_check_branch
          %479 = sbr.rel (%p477) target = $region64
        $region63: #{tpu_custom_call.1} parent=11 // pred_region
          _
        $region64: #{tpu_custom_call.1} parent=11 // pred_fallthru
          _
        // Predicated region
        $region65: #{tpu_custom_call.1} parent=11 // pred_check
          %p480 = pneg %p347
        $region66: #{tpu_custom_call.1} parent=11 // pred_check_branch
          %482 = sbr.rel (%p480) target = $region68
        $region67: #{tpu_custom_call.1} parent=11 // pred_region
          _
        $region68: #{tpu_custom_call.1} parent=11 // pred_fallthru
          _
        // Predicated region
        $region69: #{tpu_custom_call.1} parent=11 // pred_check
          %p483 = pneg %p368
        $region70: #{tpu_custom_call.1} parent=11 // pred_check_branch
          %485 = sbr.rel (%p483) target = $region72
        $region71: #{tpu_custom_call.1} parent=11 // pred_region
          _
        $region72: #{tpu_custom_call.1} parent=11 // pred_fallthru
          _
        // Predicated region
        $region73: #{tpu_custom_call.1} parent=11 // pred_check
          %p486 = pneg %p389
        $region74: #{tpu_custom_call.1} parent=11 // pred_check_branch
          %488 = sbr.rel (%p486) target = $region76
        $region75: #{tpu_custom_call.1} parent=11 // pred_region
          _
        $region76: #{tpu_custom_call.1} parent=11 // pred_fallthru
          _
      $region12: #{tpu_custom_call.1} parent=5 // pred_fallthru
        _
      %p489 = scmp.lt.s32.totalorder %s27, 2
      // Predicated region
      $region77: #{tpu_custom_call.1} parent=5 // pred_check
        %p490 = pneg %p489
      $region78: #{tpu_custom_call.1} parent=5 // pred_check_branch
        %492 = sbr.rel (%p490) target = $region80
      $region79: #{tpu_custom_call.1} parent=5 // pred_region
        // Predicated region
        $region81: #{tpu_custom_call.1} parent=79 // pred_check
          %p493 = pneg %p47
        $region82: #{tpu_custom_call.1} parent=79 // pred_check_branch
          %495 = sbr.rel (%p493) target = $region84
        $region83: #{tpu_custom_call.1} parent=79 // pred_region
          %p496 = scmp.lt.s32.totalorder %s27, 1
          %s497 = scalar_select %p496, %s27, 1
          %s498 = smul.addr %s497, 8
          %s499 = scalar_lea.vmem %s0, %s498
        $region84: #{tpu_custom_call.1} parent=79 // pred_fallthru
          _
      $region80: #{tpu_custom_call.1} parent=5 // pred_fallthru
        _
      %p500 = scmp.le.s32.totalorder 1, %s27
      %p501 = scmp.lt.s32.totalorder %s27, 3
      %p502 = pnand %p500, %p501
      %p503 = pneg %p502
      // Predicated region
      $region85: #{tpu_custom_call.1} parent=5 // pred_check
        _
      $region86: #{tpu_custom_call.1} parent=5 // pred_check_branch
        %505 = sbr.rel (%p502) target = $region88
      $region87: #{tpu_custom_call.1} parent=5 // pred_region
        %s506 = ssub.s32 %s27, 1
        // Predicated region
        $region89: #{tpu_custom_call.1} parent=87 // pred_check
          %p507 = pneg %p284
        $region90: #{tpu_custom_call.1} parent=87 // pred_check_branch
          %509 = sbr.rel (%p507) target = $region92
        $region91: #{tpu_custom_call.1} parent=87 // pred_region
          %511 = dma.done [#allocation4], 256
        $region92: #{tpu_custom_call.1} parent=87 // pred_fallthru
          _
        %p512 = scmp.lt.s32.totalorder %s32, 1
        %s513 = scalar_select %p512, %s32, 1
        %s514 = smul.addr %s513, 8
        %s515 = scalar_lea.vmem %s0, %s514
        %p516 = pneg %p53
        %p517 = pneg %p50
        %p518 = pneg %p74
        %p519 = pneg %p71
        %p520 = pneg %p95
        %p521 = pneg %p92
        %p522 = pneg %p116
        %p523 = pneg %p113
        %p524 = pneg %p137
        %p525 = pneg %p134
        %p526 = pneg %p158
        %p527 = pneg %p155
        %p528 = pneg %p179
        %p529 = pneg %p176
        %p530 = pneg %p200
        %p531 = pneg %p197
        %p532 = pneg %p221
        %p533 = pneg %p218
        %p534 = pneg %p242
        %p535 = pneg %p239
        %p536 = pneg %p263
        %p537 = pneg %p260
        %p538 = pneg %p284
        %p539 = pneg %p281
        %p540 = pneg %p305
        %p541 = pneg %p302
        %p542 = pneg %p326
        %p543 = pneg %p323
        %p544 = pneg %p347
        %p545 = pneg %p344
        %p546 = pneg %p368
        %p547 = pneg %p365
        %p548 = pneg %p389
        %p549 = pneg %p386
        %p550 = pneg %p415
        %p551 = pneg %p412
        %s552 = sand.u32 %s402, 1
        %s553 = scalar_lea.sflag [#allocation5], %s552
        %s554 = sand.u32 %s402, 1
        %s555 = smul.addr %s554, 8
        %s556 = scalar_lea.vmem [#allocation6], %s555
        %p557 = scmp.lt.s32.totalorder %s32, 1
        %s558 = scalar_select %p557, %s32, 1
        %s559 = smul.addr %s558, 8
        %s560 = scalar_lea.vmem %s0, %s559
        %v562 = vld [vmem:[%s560] sm:$0xff]
        %v563 = vpack.c.bf16 %v562, %v562
        %v564 = vld [vmem:[%s1] sm:$0xf]
        %v565 = vld [vmem:[%s1 + $0x4] sm:$0xf]
        %v566 = vld [vmem:[%s1 + $0x8] sm:$0xf]
        %v567 = vld [vmem:[%s1 + $0xc] sm:$0xf]
        %v568 = vld [vmem:[%s2] sm:$0x1]
        %v570 = vperm.slane %v568, 0
        %v576 = vunpack.c.l.b16 %v564
        %v577 = vunpack.c.l.b16 %v565
        %v578 = vunpack.c.l.b16 %v566
        %v579 = vunpack.c.l.b16 %v567
        %v580 = vpack.c.b16 %v577, %v576
        %v581 = vpack.c.b16 %v579, %v578
        %vm584 = vcmask 261120
        %v586 = vsel %vm584, %v563, 0
        %588 = vmatpush.bf16.msra.mxu0 0
        %589 = vmatpush.bf16.msra.mxu0 0
        %590 = vmatpush.bf16.msra.mxu0 0
        %591 = vmatpush.bf16.msra.mxu0 0
        %592 = vmatpush.bf16.msra.mxu0 0
        %593 = vmatpush.bf16.msra.mxu0 0
        %594 = vmatpush.bf16.msra.mxu0 %v581
        %595 = vmatpush.bf16.msra.mxu0 %v580
        %596 = vmatmul.bf16.gmra.mxu0 %v586
        %v597 = vpop.f32.mrf.mxu0
        %v598 = vadd.f32 %v570, %v597
        %v599 = vpop.f32.mrf.mxu0
        %600 = vdwg.mxu0
        %v601 = vld [vmem:[%s3] sm:$0xf]
        %v602 = vld [vmem:[%s3 + $0x4] sm:$0xf]
        %v603 = vld [vmem:[%s3 + $0x8] sm:$0xf]
        %v604 = vld [vmem:[%s3 + $0xc] sm:$0xf]
        %v605 = vld [vmem:[%s4] sm:$0x1]
        %v607 = vperm.slane %v605, 0
        %v613 = vunpack.c.l.b16 %v601
        %v614 = vunpack.c.l.b16 %v602
        %v615 = vunpack.c.l.b16 %v603
        %v616 = vunpack.c.l.b16 %v604
        %v617 = vpack.c.b16 %v614, %v613
        %v618 = vpack.c.b16 %v616, %v615
        %621 = vmatpush.bf16.msra.mxu0 0
        %622 = vmatpush.bf16.msra.mxu0 0
        %623 = vmatpush.bf16.msra.mxu0 0
        %624 = vmatpush.bf16.msra.mxu0 0
        %625 = vmatpush.bf16.msra.mxu0 0
        %626 = vmatpush.bf16.msra.mxu0 0
        %627 = vmatpush.bf16.msra.mxu0 %v618
        %628 = vmatpush.bf16.msra.mxu0 %v617
        %629 = vmatmul.bf16.gmra.mxu0 %v586
        %v630 = vpop.f32.mrf.mxu0
        %v631 = vadd.f32 %v607, %v630
        %v632 = vpop.f32.mrf.mxu0
        %633 = vdwg.mxu0
        %v634 = vld [vmem:[%s5] sm:$0xf]
        %v635 = vld [vmem:[%s5 + $0x4] sm:$0xf]
        %v636 = vld [vmem:[%s5 + $0x8] sm:$0xf]
        %v637 = vld [vmem:[%s5 + $0xc] sm:$0xf]
        %v638 = vld [vmem:[%s6] sm:$0x1]
        %v640 = vperm.slane %v638, 0
        %v646 = vunpack.c.l.b16 %v634
        %v647 = vunpack.c.l.b16 %v635
        %v648 = vunpack.c.l.b16 %v636
        %v649 = vunpack.c.l.b16 %v637
        %v650 = vpack.c.b16 %v647, %v646
        %v651 = vpack.c.b16 %v649, %v648
        %654 = vmatpush.bf16.msra.mxu0 0
        %655 = vmatpush.bf16.msra.mxu0 0
        %656 = vmatpush.bf16.msra.mxu0 0
        %657 = vmatpush.bf16.msra.mxu0 0
        %658 = vmatpush.bf16.msra.mxu0 0
        %659 = vmatpush.bf16.msra.mxu0 0
        %660 = vmatpush.bf16.msra.mxu0 %v651
        %661 = vmatpush.bf16.msra.mxu0 %v650
        %662 = vmatmul.bf16.gmra.mxu0 %v586
        %v663 = vpop.f32.mrf.mxu0
        %v664 = vadd.f32 %v640, %v663
        %v665 = vpop.f32.mrf.mxu0
        %666 = vdwg.mxu0
        %v667 = vmul.f32 %v598, 0.25
        %v668 = vlaneseq
        %v669 = vshrl.u32 %v668, 7
        %v670 = vlaneseq
        %v671 = vand.u32 %v670, 127
        %vm672 = vcmp.ge.s32.totalorder %v669, %v671
        %v673 = vpack.c.bf16 %v667, %v667
        %v674 = vpack.c.bf16 %v631, %v631
        %v675 = vpack.c.bf16 %v664, %v664
        %vm676 = vcmask 130048
        %v678 = vsel %vm676, %v673, 0
        %v681 = vsel %vm676, %v674, 0
        %683 = vmatpush.bf16.xpose.msra.mxu0 0
        %684 = vmatpush.bf16.xpose.msra.mxu0 0
        %685 = vmatpush.bf16.xpose.msra.mxu0 0
        %686 = vmatpush.bf16.xpose.msra.mxu0 0
        %687 = vmatpush.bf16.xpose.msra.mxu0 0
        %688 = vmatpush.bf16.xpose.msra.mxu0 0
        %689 = vmatpush.bf16.xpose.msra.mxu0 0
        %690 = vmatpush.bf16.xpose.msra.mxu0 %v681
        %691 = vmatmul.bf16.gmra.mxu0 %v678
        %v692 = vpop.f32.mrf.mxu0
        %v693 = vadd.f32 0.0, %v692
        %v694 = vpop.f32.mrf.mxu0
        %695 = vdwg.mxu0
        %v696 = vsel %vm672, %v693, -1e+30
        %vm697 = vcmask 64512
        %v698 = vsel %vm697, %v696, -inf
        %699 = vmax.xlane.f32.xlu0 %v698
        %v700 = vpop.xlane.xlu0 %699
        %v701 = vsub.f32 %v696, %v700
        %v702 = vmul.f32 %v701, 1.442695
        %v703 = vpow.pop %v702
        %v704 = vsel %vm697, %v703, 0.0
        %705 = vadd.xlane.f32.xlu0 %v704
        %v706 = vpop.xlane.xlu0 %705
        %v707 = vrcp.pop %v706
        %v708 = vmul.f32 %v703, %v707
        %v709 = vpack.c.bf16 %v708, %v708
        %v711 = vsel %vm697, %v709, 0
        %vm713 = vcmask 1043456
        %v715 = vsel %vm713, %v675, 0
        %717 = vmatpush.bf16.msra.mxu0 0
        %718 = vmatpush.bf16.msra.mxu0 0
        %719 = vmatpush.bf16.msra.mxu0 0
        %720 = vmatpush.bf16.msra.mxu0 0
        %721 = vmatpush.bf16.msra.mxu0 0
        %722 = vmatpush.bf16.msra.mxu0 0
        %723 = vmatpush.bf16.msra.mxu0 0
        %724 = vmatpush.bf16.msra.mxu0 %v715
        %725 = vmatmul.bf16.gmra.mxu0 %v711
        %v726 = vpop.f32.mrf.mxu0
        %v727 = vadd.f32 0.0, %v726
        %v728 = vpop.f32.mrf.mxu0
        %729 = vdwg.mxu0
        %v730 = vpack.c.bf16 %v727, %v727
        %vm731 = vcmask 125952
        %732 = vst.msk [vmem:[#allocation2] sm:$0xf] %vm731, %v730
        %734 = vrot.lane.b32.xlu0 %v673, 112
        %v735 = vpop.permute.xlu0 %734
        %737 = vrot.lane.b32.xlu0 %v674, 112
        %v738 = vpop.permute.xlu0 %737
        %v740 = vsel %vm676, %v735, 0
        %v743 = vsel %vm676, %v738, 0
        %745 = vmatpush.bf16.xpose.msra.mxu0 0
        %746 = vmatpush.bf16.xpose.msra.mxu0 0
        %747 = vmatpush.bf16.xpose.msra.mxu0 0
        %748 = vmatpush.bf16.xpose.msra.mxu0 0
        %749 = vmatpush.bf16.xpose.msra.mxu0 0
        %750 = vmatpush.bf16.xpose.msra.mxu0 0
        %751 = vmatpush.bf16.xpose.msra.mxu0 0
        %752 = vmatpush.bf16.xpose.msra.mxu0 %v743
        %753 = vmatmul.bf16.gmra.mxu0 %v740
        %v754 = vpop.f32.mrf.mxu0
        %v755 = vadd.f32 0.0, %v754
        %v756 = vpop.f32.mrf.mxu0
        %757 = vdwg.mxu0
        %v758 = vsel %vm672, %v755, -1e+30
        %v759 = vsel %vm697, %v758, -inf
        %760 = vmax.xlane.f32.xlu0 %v759
        %v761 = vpop.xlane.xlu0 %760
        %v762 = vsub.f32 %v758, %v761
        %v763 = vmul.f32 %v762, 1.442695
        %v764 = vpow.pop %v763
        %v765 = vsel %vm697, %v764, 0.0
        %766 = vadd.xlane.f32.xlu0 %v765
        %v767 = vpop.xlane.xlu0 %766
        %v768 = vrcp.pop %v767
        %v769 = vmul.f32 %v764, %v768
        %v770 = vpack.c.bf16 %v769, %v769
        %772 = vrot.lane.b32.xlu0 %v675, 112
        %v773 = vpop.permute.xlu0 %772
        %v775 = vsel %vm697, %v770, 0
        %v778 = vsel %vm713, %v773, 0
        %780 = vmatpush.bf16.msra.mxu0 0
        %781 = vmatpush.bf16.msra.mxu0 0
        %782 = vmatpush.bf16.msra.mxu0 0
        %783 = vmatpush.bf16.msra.mxu0 0
        %784 = vmatpush.bf16.msra.mxu0 0
        %785 = vmatpush.bf16.msra.mxu0 0
        %786 = vmatpush.bf16.msra.mxu0 0
        %787 = vmatpush.bf16.msra.mxu0 %v778
        %788 = vmatmul.bf16.gmra.mxu0 %v775
        %v789 = vpop.f32.mrf.mxu0
        %v790 = vadd.f32 0.0, %v789
        %v791 = vpop.f32.mrf.mxu0
        %792 = vdwg.mxu0
        %v793 = vpack.c.bf16 %v790, %v790
        %795 = vrot.lane.b32.xlu0 %v793, 16
        %v796 = vpop.permute.xlu0 %795
        %vm798 = vcmask 257152
        %799 = vst.msk [vmem:[#allocation2] sm:$0xf] %vm798, %v796
        %v800 = vld [vmem:[#allocation2] sm:$0xf]
        %v801 = vld [vmem:[%s7] sm:$0xf]
        %v802 = vld [vmem:[%s7 + $0x4] sm:$0xf]
        %v803 = vld [vmem:[%s7 + $0x8] sm:$0xf]
        %v804 = vld [vmem:[%s7 + $0xc] sm:$0xf]
        %v805 = vld [vmem:[%s8] sm:$0x1]
        %v807 = vperm.slane %v805, 0
        %v813 = vunpack.c.l.b16 %v801
        %v814 = vunpack.c.l.b16 %v802
        %v815 = vunpack.c.l.b16 %v803
        %v816 = vunpack.c.l.b16 %v804
        %v817 = vpack.c.b16 %v814, %v813
        %v818 = vpack.c.b16 %v816, %v815
        %v822 = vsel %vm584, %v800, 0
        %824 = vmatpush.bf16.msra.mxu0 0
        %825 = vmatpush.bf16.msra.mxu0 0
        %826 = vmatpush.bf16.msra.mxu0 0
        %827 = vmatpush.bf16.msra.mxu0 0
        %828 = vmatpush.bf16.msra.mxu0 0
        %829 = vmatpush.bf16.msra.mxu0 0
        %830 = vmatpush.bf16.msra.mxu0 %v818
        %831 = vmatpush.bf16.msra.mxu0 %v817
        %832 = vmatmul.bf16.gmra.mxu0 %v822
        %v833 = vpop.f32.mrf.mxu0
        %v834 = vadd.f32 %v807, %v833
        %v835 = vpop.f32.mrf.mxu0
        %836 = vdwg.mxu0
        %v837 = vadd.f32 %v562, %v834
        %v838 = vld [vmem:[%s9] sm:$0x1]
        %v839 = vld [vmem:[%s10] sm:$0x1]
        %v840 = vsel %vm584, %v837, 0.0
        %841 = vadd.xlane.f32.xlu0 %v840
        %v842 = vpop.xlane.xlu0 %841
        %v843 = vrcp.pop 32.0
        %v844 = vmul.f32 32.0, %v843
        %v845 = vsub.f32 1.0, %v844
        %v846 = vmul.f32 %v843, %v845
        %v847 = vadd.f32 %v843, %v846
        %vm848 = vweird.f32 %v843
        %v849 = vsel %vm848, %v843, %v847
        %v850 = vmul.f32 %v842, %v849
        %v851 = vsub.f32 %v837, %v850
        %v852 = vmul.f32 %v851, %v851
        %v853 = vsel %vm584, %v852, 0.0
        %854 = vadd.xlane.f32.xlu0 %v853
        %v855 = vpop.xlane.xlu0 %854
        %v856 = vmul.f32 %v855, %v849
        %v857 = vadd.f32 %v856, 1e-05
        %v858 = vrsqrt.pop %v857
        %v859 = vmul.f32 %v858, %v857
        %v860 = vmul.f32 %v859, %v858
        %v861 = vmul.f32 0.5, %v860
        %v862 = vsub.f32 1.5, %v861
        %v863 = vmul.f32 %v858, %v862
        %vm864 = vweird.f32 %v857
        %vm865 = vweird.f32 %v858
        %vm866 = vmor %vm864, %vm865
        %v867 = vsel %vm866, %v858, %v863
        %v868 = vmul.f32 %v851, %v867
        %v870 = vperm.slane %v838, 0
        %v872 = vmul.f32 %v868, %v870
        %v874 = vperm.slane %v839, 0
        %v876 = vadd.f32 %v872, %v874
        %v877 = vpack.c.bf16 %v876, %v876
        %v878 = vld [vmem:[#allocation3] sm:$0xf]
        %v879 = vld [vmem:[#allocation3 + $0x4] sm:$0xf]
        %v880 = vld [vmem:[#allocation3 + $0x8] sm:$0xf]
        %v881 = vld [vmem:[#allocation3 + $0xc] sm:$0xf]
        %v882 = vld [vmem:[%s12] sm:$0x1]
        %v884 = vperm.slane %v882, 0
        %v890 = vunpack.c.l.b16 %v878
        %v891 = vunpack.c.l.b16 %v879
        %v892 = vunpack.c.l.b16 %v880
        %v893 = vunpack.c.l.b16 %v881
        %v894 = vpack.c.b16 %v891, %v890
        %v895 = vpack.c.b16 %v893, %v892
        %v899 = vsel %vm584, %v877, 0
        %901 = vmatpush.bf16.msra.mxu0 0
        %902 = vmatpush.bf16.msra.mxu0 0
        %903 = vmatpush.bf16.msra.mxu0 0
        %904 = vmatpush.bf16.msra.mxu0 0
        %905 = vmatpush.bf16.msra.mxu0 0
        %906 = vmatpush.bf16.msra.mxu0 0
        %907 = vmatpush.bf16.msra.mxu0 %v895
        %908 = vmatpush.bf16.msra.mxu0 %v894
        %909 = vmatmul.bf16.gmra.mxu0 %v899
        %v910 = vpop.f32.mrf.mxu0
        %v911 = vadd.f32 %v884, %v910
        %v912 = vpop.f32.mrf.mxu0
        %913 = vdwg.mxu0
        %v914 = vmax.f32 %v911, 0.0
        %v915 = vpack.c.bf16 %v914, %v914
        %v916 = vld [vmem:[%s13] sm:$0xf]
        %v917 = vld [vmem:[%s13 + $0x4] sm:$0xf]
        %v918 = vld [vmem:[%s13 + $0x8] sm:$0xf]
        %v919 = vld [vmem:[%s13 + $0xc] sm:$0xf]
        %v920 = vld [vmem:[%s13 + $0x10] sm:$0xf]
        %v921 = vld [vmem:[%s13 + $0x14] sm:$0xf]
        %v922 = vld [vmem:[%s13 + $0x18] sm:$0xf]
        %v923 = vld [vmem:[%s13 + $0x1c] sm:$0xf]
        %v924 = vld [vmem:[%s13 + $0x20] sm:$0xf]
        %v925 = vld [vmem:[%s13 + $0x24] sm:$0xf]
        %v926 = vld [vmem:[%s13 + $0x28] sm:$0xf]
        %v927 = vld [vmem:[%s13 + $0x2c] sm:$0xf]
        %v928 = vld [vmem:[%s13 + $0x30] sm:$0xf]
        %v929 = vld [vmem:[%s13 + $0x34] sm:$0xf]
        %v930 = vld [vmem:[%s13 + $0x38] sm:$0xf]
        %v931 = vld [vmem:[%s13 + $0x3c] sm:$0xf]
        %v932 = vld [vmem:[%s14] sm:$0x1]
        %v934 = vperm.slane %v932, 0
        %v952 = vunpack.c.l.b16 %v916
        %v953 = vunpack.c.l.b16 %v917
        %v954 = vunpack.c.l.b16 %v918
        %v955 = vunpack.c.l.b16 %v919
        %v956 = vunpack.c.l.b16 %v920
        %v957 = vunpack.c.l.b16 %v921
        %v958 = vunpack.c.l.b16 %v922
        %v959 = vunpack.c.l.b16 %v923
        %v960 = vunpack.c.l.b16 %v924
        %v961 = vunpack.c.l.b16 %v925
        %v962 = vunpack.c.l.b16 %v926
        %v963 = vunpack.c.l.b16 %v927
        %v964 = vunpack.c.l.b16 %v928
        %v965 = vunpack.c.l.b16 %v929
        %v966 = vunpack.c.l.b16 %v930
        %v967 = vunpack.c.l.b16 %v931
        %v968 = vpack.c.b16 %v953, %v952
        %v969 = vpack.c.b16 %v955, %v954
        %v970 = vpack.c.b16 %v957, %v956
        %v971 = vpack.c.b16 %v959, %v958
        %v972 = vpack.c.b16 %v961, %v960
        %v973 = vpack.c.b16 %v963, %v962
        %v974 = vpack.c.b16 %v965, %v964
        %v975 = vpack.c.b16 %v967, %v966
        %984 = vmatpush.bf16.msra.mxu0 %v975
        %985 = vmatpush.bf16.msra.mxu0 %v974
        %986 = vmatpush.bf16.msra.mxu0 %v973
        %987 = vmatpush.bf16.msra.mxu0 %v972
        %988 = vmatpush.bf16.msra.mxu0 %v971
        %989 = vmatpush.bf16.msra.mxu0 %v970
        %990 = vmatpush.bf16.msra.mxu0 %v969
        %991 = vmatpush.bf16.msra.mxu0 %v968
        %992 = vmatmul.bf16.gmra.mxu0 %v915
        %v993 = vpop.f32.mrf.mxu0
        %v994 = vadd.f32 %v934, %v993
        %v995 = vpop.f32.mrf.mxu0
        %996 = vdwg.mxu0
        %v997 = vadd.f32 %v876, %v994
        %v998 = vld [vmem:[%s15] sm:$0x1]
        %v999 = vld [vmem:[%s16] sm:$0x1]
        %v1000 = vsel %vm584, %v997, 0.0
        %1001 = vadd.xlane.f32.xlu0 %v1000
        %v1002 = vpop.xlane.xlu0 %1001
        %v1003 = vmul.f32 %v1002, %v849
        %v1004 = vsub.f32 %v997, %v1003
        %v1005 = vmul.f32 %v1004, %v1004
        %v1006 = vsel %vm584, %v1005, 0.0
        %1007 = vadd.xlane.f32.xlu0 %v1006
        %v1008 = vpop.xlane.xlu0 %1007
        %v1009 = vmul.f32 %v1008, %v849
        %v1010 = vadd.f32 %v1009, 1e-05
        %v1011 = vrsqrt.pop %v1010
        %v1012 = vmul.f32 %v1011, %v1010
        %v1013 = vmul.f32 %v1012, %v1011
        %v1014 = vmul.f32 0.5, %v1013
        %v1015 = vsub.f32 1.5, %v1014
        %v1016 = vmul.f32 %v1011, %v1015
        %vm1017 = vweird.f32 %v1010
        %vm1018 = vweird.f32 %v1011
        %vm1019 = vmor %vm1017, %vm1018
        %v1020 = vsel %vm1019, %v1011, %v1016
        %v1021 = vmul.f32 %v1004, %v1020
        %v1023 = vperm.slane %v998, 0
        %v1025 = vmul.f32 %v1021, %v1023
        %v1027 = vperm.slane %v999, 0
        %v1029 = vadd.f32 %v1025, %v1027
        %1030 = vst.msk [vmem:[%s556] sm:$0xff] %vm584, %v1029
        %s1031 = sand.u32 %s402, 1
        %s1032 = scalar_lea.sflag [#allocation5], %s1031
        %s1033 = sand.u32 %s402, 1
        %s1034 = smul.addr %s1033, 8
        %s1035 = scalar_lea.vmem [#allocation6], %s1034
        // Predicated region
        $region93: #{tpu_custom_call.1} parent=87 // pred_check
          %p1036 = pneg %p412
        $region94: #{tpu_custom_call.1} parent=87 // pred_check_branch
          %1038 = sbr.rel (%p1036) target = $region96
        $region95: #{tpu_custom_call.1} parent=87 // pred_region
          %1040 = vsyncadd %s1032, 0
          %s1041 = smul.addr %s32, 8
          %s1042 = scalar_lea.hbm %s17, %s1041
          %s1044 = sshll.u32 %s1035, 4
          %s1045 = int_to_ptr.vmem [resolvable:$true] %s1044
          %s1046 = sshll.u32 %s1042, 4
          %s1047 = int_to_ptr.hbm [resolvable:$true] %s1046
          %1049 = dma.vmem_to_hbm [thread:$0]  %s1045, 128, %s1047, %s1032
        $region96: #{tpu_custom_call.1} parent=87 // pred_fallthru
          _
      $region88: #{tpu_custom_call.1} parent=5 // pred_fallthru
        _
      %p1050 = scmp.le.s32.totalorder 2, %s27
      // Predicated region
      $region97: #{tpu_custom_call.1} parent=5 // pred_check
        %p1051 = pneg %p1050
      $region98: #{tpu_custom_call.1} parent=5 // pred_check_branch
        %1053 = sbr.rel (%p1051) target = $region100
      $region99: #{tpu_custom_call.1} parent=5 // pred_region
        %s1054 = ssub.s32 %s27, 2
        // Predicated region
        $region101: #{tpu_custom_call.1} parent=99 // pred_check
          %p1055 = pneg %p418
        $region102: #{tpu_custom_call.1} parent=99 // pred_check_branch
          %1057 = sbr.rel (%p1055) target = $region104
        $region103: #{tpu_custom_call.1} parent=99 // pred_region
          %s1058 = sand.u32 %s403, 1
          %s1059 = scalar_lea.sflag [#allocation5], %s1058
          %s1060 = sand.u32 %s403, 1
          %s1061 = smul.addr %s1060, 8
          %s1062 = scalar_lea.vmem [#allocation6], %s1061
          %1064 = dma.done %s1059, 128
        $region104: #{tpu_custom_call.1} parent=99 // pred_fallthru
          _
      $region100: #{tpu_custom_call.1} parent=5 // pred_fallthru
        _
    $region6: #{tpu_custom_call.1} parent=1 // loop_footer
      %s31 = sadd.s32 1, %s27
    $region7: #{tpu_custom_call.1} parent=1 // loop_footer_branch
      %26 = sbr.rel target = $region3
    $region8: #{tpu_custom_call.1} parent=1 // loop_exit
      _
    %1065 = vsyncpa [#allocation4], 1
    %s1066 = scalar_lea.sflag [#allocation4], 1
    %1067 = vsyncpa %s1066, 1
    %1068 = vsyncpa [#allocation5], 1
    %s1069 = scalar_lea.sflag [#allocation5], 1
    %1070 = vsyncpa %s1069, 1

</llo_original>
